<compile_context>
chip_gen: v6e
topology: v6e:2x2x1
jax: 0.10.0
libtpu: 0.0.40
codegen_flags: <defaults>
</compile_context>

<pallas_src>
import jax
import jax.numpy as jnp
from jax import lax
from jax.experimental import pallas as pl
from jax.experimental.pallas import tpu as pltpu

NEG_SLOPE = 0.01  # torch.nn.LeakyReLU default


def _round_up(x, m):
    return ((x + m - 1) // m) * m


def _pads(d, k):
    """'same' padding of a dilated conv (PyTorch convention: left = total // 2)."""
    total = d * (k - 1)
    left = total // 2
    return left, total - left


def _make_kernel(dilations, K, TT, T_ext, H8, PAD, Cp, Cw, t_real, fuse_taps):
    M = len(dilations)
    L = len(dilations[0])

    def kernel(xl_ref, xc_ref, xr_ref, w_ref, b_ref, out_ref, buf_ref):
        t = pl.program_id(1)

        if not fuse_taps:
            # Per-tap reads reach a few rows around the stored activation;
            # keep those rows zero (window-edge zero padding).  The fused path
            # only ever reads the centre rows, so it skips this.
            buf_ref[pl.ds(0, PAD), :] = jnp.zeros((PAD, Cw), jnp.bfloat16)
            buf_ref[pl.ds(PAD + T_ext, PAD), :] = jnp.zeros((PAD, Cw), jnp.bfloat16)

        # Rows of this halo-extended tile outside the real sequence [0, t_real)
        # must act as the convs' zero padding at *every* layer.
        row = lax.broadcasted_iota(jnp.int32, (T_ext, 1), 0)
        g = t * TT + row - H8                  # global time position per row
        valid = (g >= 0) & (g < t_real)        # (T_ext, 1)

        # Assemble the halo'd window; residual chain stays in f32.
        h = jnp.concatenate(
            [xl_ref[...], xc_ref[...], xr_ref[...]], axis=0).astype(jnp.float32)

        idx = 0
        for m in range(M):
            res = h
            cur = h
            for l in range(L):
                d = dilations[m][l]
                left = d * (K - 1) // 2

                # LeakyReLU in f32, a single bf16 cast for the MXU.
                a = jnp.where(cur > 0, cur, NEG_SLOPE * cur).astype(jnp.bfloat16)

                if fuse_taps:
                    # Store the activation K times at shifted row offsets so a
                    # single (T_ext, K*Cp) load feeds one MXU contraction over
                    # K*Cp (keeps the 256-deep MXU full at Cp == 128).  Rows of
                    # the buffer not covered by these stores only affect halo
                    # rows, which are discarded.
                    for k in range(K):
                        buf_ref[pl.ds(PAD + left - k * d, T_ext),
                                pl.ds(k * Cp, Cp)] = a
                    xs = buf_ref[pl.ds(PAD, T_ext), :]
                    y = jnp.dot(xs, w_ref[pl.ds(idx * K * Cp, K * Cp), :],
                                preferred_element_type=jnp.float32)
                else:
                    # One aligned store, K shifted reads, K per-tap dots.
                    buf_ref[pl.ds(PAD, T_ext), :] = a
                    y = jnp.zeros((T_ext, Cp), jnp.float32)
                    for k in range(K):
                        tap = buf_ref[pl.ds(PAD - left + k * d, T_ext), :]
                        wk = w_ref[pl.ds((idx * K + k) * Cp, Cp), :]
                        y = y + jnp.dot(tap, wk,
                                        preferred_element_type=jnp.float32)

                y = y + b_ref[pl.ds(idx, 1), :]
                # Re-impose Conv1d zero padding outside the real sequence.
                cur = jnp.where(valid, y, 0.0)
                idx += 1
            h = res + cur                      # residual add per dilation group

        out_ref[...] = h[H8:H8 + TT, :].astype(out_ref.dtype)

    return kernel


def resblock_pallas(x_nct, weights, biases, dilations, K, *, tile_t=None):
    """x_nct: (N, C, T).  weights[i]: (C, C, K) effective weights (g/||v||
    pre-folded).  biases[i]: (C,).  Returns (N, C, T) in x_nct's dtype."""
    B, C, T = x_nct.shape
    M, L = len(dilations), len(dilations[0])
    nconv = M * L
    assert len(weights) == nconv and len(biases) == nconv

    Cp = _round_up(C, 128)                     # lane-dense channels

    pads = [_pads(d, K) for row in dilations for d in row]
    HL = sum(l for l, _ in pads)
    HR = sum(r for _, r in pads)
    H8 = _round_up(max(HL, HR, 1), 8)          # symmetric, sublane-aligned halo
    max_l = max(l for l, _ in pads)
    max_r = max(r for _, r in pads)
    PAD = _round_up(max(max_l, max_r, 1), 8)   # shift headroom in the scratch

    # ---- generation-aware knobs (perf only; never affects numerics) -------
    kind = ""
    try:
        kind = jax.devices()[0].device_kind.lower()
    except Exception:
        pass
    is_v5e = ("v5 lite" in kind) or ("v5e" in kind) or ("v5lite" in kind)
    is_v7 = "7" in kind
    if tile_t is None:
        tile_t = 512 if is_v7 else 1024        # 64 MiB VMEM on v7x vs 128 MiB
    vmem_cap = (48 << 20) if is_v7 else (96 << 20)

    # Tap fusion fills the 256-deep MXU on v6e/v7x at Cp == 128; pointless on
    # v5e's 128-deep MXU, and a single tap already fills it for Cp >= 256.
    fuse_taps = (Cp == 128) and (not is_v5e) and (K > 1) and (K * Cp <= 1024)
    Cw = K * Cp if fuse_taps else Cp

    # Time tile: a multiple of H8 so the halo blocks are Blocked-indexable.
    TT = max(8, min(int(tile_t), _round_up(T, 8)))
    TT = max(H8, _round_up(TT, H8))

    def vmem_need(tt):
        t_ext = tt + 2 * H8
        blocks = 2 * (t_ext * Cp * 2) + 2 * (tt * Cp * 2)        # in + out (dbl-buffered)
        consts = 2 * (nconv * K * Cp * Cp * 2 + nconv * Cp * 4)  # packed w + b
        scratch = (2 * PAD + t_ext) * Cw * 2
        temps = 8 * t_ext * max(Cp, Cw) * 4                      # f32 value temporaries
        return blocks + consts + scratch + temps

    while vmem_need(TT) + (8 << 20) > vmem_cap and TT > H8:
        TT = max(H8, _round_up(TT // 2, H8))

    nT = -(-T // TT)
    Tp = nT * TT
    T_ext = TT + 2 * H8
    buf_rows = 2 * PAD + T_ext
    r = TT // H8
    vmem_limit = int(min(vmem_cap, max(32 << 20, vmem_need(TT) + (8 << 20))))

    # ---- host-side packing (single bf16 copy of x, no per-tile windows) ---
    x_t = jnp.transpose(x_nct, (0, 2, 1)).astype(jnp.bfloat16)   # (B, T, C)
    # Left time pad of one full tile keeps centre-block offsets multiples of
    # TT; right pad covers the ragged tail plus the right halo.
    x_pad = jnp.pad(x_t, ((0, 0), (TT, (Tp - T) + H8), (0, Cp - C)))

    w_blocks = []
    for w in weights:                                  # torch layout (C_out, C_in, K)
        wt = jnp.transpose(w, (2, 1, 0))               # (K, C_in, C_out)
        wt = jnp.pad(wt, ((0, 0), (0, Cp - C), (0, Cp - C)))
        w_blocks.append(wt.reshape(K * Cp, Cp))
    w_packed = jnp.concatenate(w_blocks, axis=0).astype(jnp.bfloat16)      # (nconv*K*Cp, Cp)
    b_packed = jnp.stack([jnp.pad(b, (0, Cp - C)) for b in biases],
                         axis=0).astype(jnp.float32)                       # (nconv, Cp)

    kernel = _make_kernel(dilations, K, TT, T_ext, H8, PAD, Cp, Cw, T, fuse_taps)

    cost = pl.CostEstimate(
        flops=int(2 * B * T * C * C * K * nconv),
        transcendentals=0,
        bytes_accessed=int(2 * B * Tp * Cp * 2                  # in + out (bf16)
                           + 2 * B * nT * H8 * Cp * 2           # halo re-reads
                           + nconv * K * Cp * Cp * 2 + nconv * Cp * 4),
    )

    in_specs = [
        # left halo, centre, right halo -- three Blocked views of the same array
        pl.BlockSpec((None, H8, Cp), lambda b, t: (b, (t + 1) * r - 1, 0)),
        pl.BlockSpec((None, TT, Cp), lambda b, t: (b, t + 1, 0)),
        pl.BlockSpec((None, H8, Cp), lambda b, t: (b, (t + 2) * r, 0)),
        # packed constants: block index never changes -> fetched once
        pl.BlockSpec((nconv * K * Cp, Cp), lambda b, t: (0, 0)),
        pl.BlockSpec((nconv, Cp), lambda b, t: (0, 0)),
    ]

    out = pl.pallas_call(
        kernel,
        out_shape=jax.ShapeDtypeStruct((B, Tp, Cp), jnp.bfloat16),
        grid=(B, nT),
        in_specs=in_specs,
        out_specs=pl.BlockSpec((None, TT, Cp), lambda b, t: (b, t, 0)),
        scratch_shapes=[pltpu.VMEM((buf_rows, Cw), jnp.bfloat16)],
        compiler_params=pltpu.CompilerParams(
            dimension_semantics=("parallel", "parallel"),
            vmem_limit_bytes=vmem_limit,
        ),
        cost_estimate=cost,
    )(x_pad, x_pad, x_pad, w_packed, b_packed)

    out = out[:, :T, :C]
    return jnp.transpose(out, (0, 2, 1)).astype(x_nct.dtype)     # (N, C, T)


def resblock_ref(x, weights, biases, dilations, K):
    """Pure-JAX reference (lax.conv) mirroring the PyTorch forward exactly."""
    L = len(dilations[0])
    for m in range(len(dilations)):
        res = x
        cur = x
        for l in range(L):
            idx = m * L + l
            d = dilations[m][l]
            a = jnp.where(cur > 0, cur, NEG_SLOPE * cur)
            left, right = _pads(d, K)
            y = lax.conv_general_dilated(
                a, weights[idx],
                window_strides=(1,),
                padding=[(left, right)],
                rhs_dilation=(d,),
                dimension_numbers=("NCW", "OIW", "NCW"),
            )
            cur = y + biases[idx][None, :, None]
        x = res + cur
    return x


if __name__ == "__main__":
    root = jax.random.PRNGKey(0)

    def run_case(B, C, T, K, dilations, tile_t, key):
        nconv = len(dilations) * len(dilations[0])
        keys = jax.random.split(key, 1 + 2 * nconv)
        x = jax.random.normal(keys[0], (B, C, T), dtype=jnp.float32)
        bound = 1.0 / (C * K) ** 0.5           # PyTorch Conv1d default init scale
        weights, biases = [], []
        for i in range(nconv):
            weights.append(jax.random.uniform(keys[1 + 2 * i], (C, C, K),
                                              jnp.float32, -bound, bound))
            biases.append(jax.random.uniform(keys[2 + 2 * i], (C,),
                                             jnp.float32, -bound, bound))
        out = jax.block_until_ready(
            resblock_pallas(x, weights, biases, dilations, K, tile_t=tile_t))
        assert out.shape == x.shape and out.dtype == x.dtype
        ref = resblock_ref(x, weights, biases, dilations, K)
        err = float(jnp.max(jnp.abs(out - ref)))
        scale = float(jnp.max(jnp.abs(ref)))
        # bf16 MXU inputs / bf16 I/O -> compare with a scale-relative tolerance.
        tol = 3e-2 * scale + 3e-3
        assert err <= tol, f"mismatch vs reference: max abs err {err} (tol {tol})"

    k1, k2, k3 = jax.random.split(root, 3)
    # Single time tile, fused-tap path (Cp = 128).
    run_case(B=2, C=8, T=32, K=3, dilations=[[1, 2], [3, 1]], tile_t=512, key=k1)
    # Multi-tile + ragged T (halo recompute + boundary masking), fused path.
    run_case(B=2, C=8, T=72, K=3, dilations=[[1, 2], [3, 1]], tile_t=32, key=k2)
    # Wider channels (Cp = 256): per-tap unfused MXU path.
    run_case(B=1, C=192, T=40, K=3, dilations=[[1, 2], [3, 1]], tile_t=64, key=k3)

    print("KERNEL_OK")
</pallas_src>

<mosaic_0001>
module attributes {stable_mosaic.version = 11 : i64} {
  func.func @kernel(%arg0: i32, %arg1: i32, %arg2: memref<1x8x128xbf16, #tpu.memory_space<vmem>>, %arg3: memref<1x32x128xbf16, #tpu.memory_space<vmem>>, %arg4: memref<1x8x128xbf16, #tpu.memory_space<vmem>>, %arg5: memref<1536x128xbf16, #tpu.memory_space<vmem>>, %arg6: memref<4x128xf32, #tpu.memory_space<vmem>>, %arg7: memref<1x32x128xbf16, #tpu.memory_space<vmem>>, %arg8: memref<64x384xbf16, #tpu.memory_space<vmem>>) attributes {dimension_semantics = [#tpu.dimension_semantics<parallel>, #tpu.dimension_semantics<parallel>], iteration_bounds = array<i64: 2, 1>, scalar_prefetch = 0 : i64, scratch_operands = 1 : i64, tpu.core_type = #tpu.core_type<tc>, window_params = [{transform_indices = @transform_0, window_bounds = array<i64: 1, 8, 128>}, {transform_indices = @transform_1, window_bounds = array<i64: 1, 32, 128>}, {transform_indices = @transform_2, window_bounds = array<i64: 1, 8, 128>}, {pipeline_mode = #tpu.pipeline_mode<synchronous>, transform_indices = @transform_3, window_bounds = array<i64: 1536, 128>}, {pipeline_mode = #tpu.pipeline_mode<synchronous>, transform_indices = @transform_4, window_bounds = array<i64: 4, 128>}, {transform_indices = @transform_5, window_bounds = array<i64: 1, 32, 128>}]} {
    %0 = tpu.iota {dimensions = array<i32: 0>} : vector<48x1xi32>
    %c32_i32 = arith.constant 32 : i32
    %1 = arith.muli %arg1, %c32_i32 : i32
    %2 = vector.broadcast %1 : i32 to vector<48x1xi32>
    %3 = arith.addi %2, %0 : vector<48x1xi32>
    %c8_i32 = arith.constant 8 : i32
    %4 = vector.broadcast %c8_i32 : i32 to vector<48x1xi32>
    %5 = arith.subi %3, %4 : vector<48x1xi32>
    %c0_i32 = arith.constant 0 : i32
    %6 = vector.broadcast %c0_i32 : i32 to vector<48x1xi32>
    %7 = arith.cmpi sge, %5, %6 : vector<48x1xi32>
    %c32_i32_0 = arith.constant 32 : i32
    %8 = vector.broadcast %c32_i32_0 : i32 to vector<48x1xi32>
    %9 = arith.cmpi slt, %5, %8 : vector<48x1xi32>
    %10 = arith.andi %7, %9 : vector<48x1xi1>
    %c0 = arith.constant 0 : index
    %c0_1 = arith.constant 0 : index
    %c0_2 = arith.constant 0 : index
    %11 = vector.load %arg2[%c0, %c0_1, %c0_2] : memref<1x8x128xbf16, #tpu.memory_space<vmem>>, vector<1x8x128xbf16>
    %12 = vector.shape_cast %11 : vector<1x8x128xbf16> to vector<8x128xbf16>
    %c0_3 = arith.constant 0 : index
    %c0_4 = arith.constant 0 : index
    %c0_5 = arith.constant 0 : index
    %13 = vector.load %arg3[%c0_3, %c0_4, %c0_5] : memref<1x32x128xbf16, #tpu.memory_space<vmem>>, vector<1x32x128xbf16>
    %14 = vector.shape_cast %13 : vector<1x32x128xbf16> to vector<32x128xbf16>
    %c0_6 = arith.constant 0 : index
    %c0_7 = arith.constant 0 : index
    %c0_8 = arith.constant 0 : index
    %15 = vector.load %arg4[%c0_6, %c0_7, %c0_8] : memref<1x8x128xbf16, #tpu.memory_space<vmem>>, vector<1x8x128xbf16>
    %16 = vector.shape_cast %15 : vector<1x8x128xbf16> to vector<8x128xbf16>
    %17 = tpu.concatenate %12, %14, %16 in 0 : vector<8x128xbf16>, vector<32x128xbf16>, vector<8x128xbf16> -> vector<48x128xbf16>
    %18 = arith.extf %17 : vector<48x128xbf16> to vector<48x128xf32>
    %cst = arith.constant 0.000000e+00 : f32
    %19 = vector.broadcast %cst : f32 to vector<48x128xf32>
    %20 = arith.cmpf ogt, %18, %19 : vector<48x128xf32>
    %cst_9 = arith.constant 0.00999999977 : f32
    %21 = vector.broadcast %cst_9 : f32 to vector<48x128xf32>
    %22 = arith.mulf %21, %18 : vector<48x128xf32>
    %23 = arith.select %20, %18, %22 : vector<48x128xi1>, vector<48x128xf32>
    %24 = arith.truncf %23 : vector<48x128xf32> to vector<48x128xbf16>
    %c9 = arith.constant 9 : index
    %c0_10 = arith.constant 0 : index
    %25 = vector.load %arg8[%c9, %c0_10] : memref<64x384xbf16, #tpu.memory_space<vmem>>, vector<48x128xbf16>
    tpu.vector_store %arg8[%c9, %c0_10], %24 {strides = array<i32>} : memref<64x384xbf16, #tpu.memory_space<vmem>>, vector<48x128xbf16>,
    %c8 = arith.constant 8 : index
    %c128 = arith.constant 128 : index
    %26 = vector.load %arg8[%c8, %c128] : memref<64x384xbf16, #tpu.memory_space<vmem>>, vector<48x128xbf16>
    tpu.vector_store %arg8[%c8, %c128], %24 {strides = array<i32>} : memref<64x384xbf16, #tpu.memory_space<vmem>>, vector<48x128xbf16>,
    %c7 = arith.constant 7 : index
    %c256 = arith.constant 256 : index
    %27 = vector.load %arg8[%c7, %c256] : memref<64x384xbf16, #tpu.memory_space<vmem>>, vector<48x128xbf16>
    tpu.vector_store %arg8[%c7, %c256], %24 {strides = array<i32>} : memref<64x384xbf16, #tpu.memory_space<vmem>>, vector<48x128xbf16>,
    %c8_11 = arith.constant 8 : index
    %c0_12 = arith.constant 0 : index
    %28 = vector.load %arg8[%c8_11, %c0_12] : memref<64x384xbf16, #tpu.memory_space<vmem>>, vector<48x384xbf16>
    %c0_13 = arith.constant 0 : index
    %c0_14 = arith.constant 0 : index
    %29 = vector.load %arg5[%c0_13, %c0_14] : memref<1536x128xbf16, #tpu.memory_space<vmem>>, vector<384x128xbf16>
    %cst_15 = arith.constant dense<0.000000e+00> : vector<48x128xf32>
    %30 = tpu.matmul %28, %29, %cst_15 {dimension_numbers = #tpu.dot_dimension_numbers<[1], [0], [0], [1], [0, 0, 1, 1], [], []>} : vector<48x384xbf16>, vector<384x128xbf16>, vector<48x128xf32> -> vector<48x128xf32>
    %c0_16 = arith.constant 0 : index
    %c0_17 = arith.constant 0 : index
    %31 = vector.load %arg6[%c0_16, %c0_17] : memref<4x128xf32, #tpu.memory_space<vmem>>, vector<1x128xf32>
    %32 = vector.broadcast %31 : vector<1x128xf32> to vector<48x128xf32>
    %33 = arith.addf %30, %32 : vector<48x128xf32>
    %cst_18 = arith.constant 0.000000e+00 : f32
    %34 = vector.shape_cast %10 : vector<48x1xi1> to vector<48x1xi1>
    %35 = vector.broadcast %34 : vector<48x1xi1> to vector<48x128xi1>
    %36 = vector.broadcast %cst_18 : f32 to vector<48x128xf32>
    %37 = arith.select %35, %33, %36 : vector<48x128xi1>, vector<48x128xf32>
    %cst_19 = arith.constant 0.000000e+00 : f32
    %38 = vector.broadcast %cst_19 : f32 to vector<48x128xf32>
    %39 = arith.cmpf ogt, %37, %38 : vector<48x128xf32>
    %cst_20 = arith.constant 0.00999999977 : f32
    %40 = vector.broadcast %cst_20 : f32 to vector<48x128xf32>
    %41 = arith.mulf %40, %37 : vector<48x128xf32>
    %42 = arith.select %39, %37, %41 : vector<48x128xi1>, vector<48x128xf32>
    %43 = arith.truncf %42 : vector<48x128xf32> to vector<48x128xbf16>
    %c10 = arith.constant 10 : index
    %c0_21 = arith.constant 0 : index
    %44 = vector.load %arg8[%c10, %c0_21] : memref<64x384xbf16, #tpu.memory_space<vmem>>, vector<48x128xbf16>
    tpu.vector_store %arg8[%c10, %c0_21], %43 {strides = array<i32>} : memref<64x384xbf16, #tpu.memory_space<vmem>>, vector<48x128xbf16>,
    %c8_22 = arith.constant 8 : index
    %c128_23 = arith.constant 128 : index
    %45 = vector.load %arg8[%c8_22, %c128_23] : memref<64x384xbf16, #tpu.memory_space<vmem>>, vector<48x128xbf16>
    tpu.vector_store %arg8[%c8_22, %c128_23], %43 {strides = array<i32>} : memref<64x384xbf16, #tpu.memory_space<vmem>>, vector<48x128xbf16>,
    %c6 = arith.constant 6 : index
    %c256_24 = arith.constant 256 : index
    %46 = vector.load %arg8[%c6, %c256_24] : memref<64x384xbf16, #tpu.memory_space<vmem>>, vector<48x128xbf16>
    tpu.vector_store %arg8[%c6, %c256_24], %43 {strides = array<i32>} : memref<64x384xbf16, #tpu.memory_space<vmem>>, vector<48x128xbf16>,
    %c8_25 = arith.constant 8 : index
    %c0_26 = arith.constant 0 : index
    %47 = vector.load %arg8[%c8_25, %c0_26] : memref<64x384xbf16, #tpu.memory_space<vmem>>, vector<48x384xbf16>
    %c384 = arith.constant 384 : index
    %c0_27 = arith.constant 0 : index
    %48 = vector.load %arg5[%c384, %c0_27] : memref<1536x128xbf16, #tpu.memory_space<vmem>>, vector<384x128xbf16>
    %cst_28 = arith.constant dense<0.000000e+00> : vector<48x128xf32>
    %49 = tpu.matmul %47, %48, %cst_28 {dimension_numbers = #tpu.dot_dimension_numbers<[1], [0], [0], [1], [0, 0, 1, 1], [], []>} : vector<48x384xbf16>, vector<384x128xbf16>, vector<48x128xf32> -> vector<48x128xf32>
    %c1 = arith.constant 1 : index
    %c0_29 = arith.constant 0 : index
    %50 = vector.load %arg6[%c1, %c0_29] : memref<4x128xf32, #tpu.memory_space<vmem>>, vector<1x128xf32>
    %51 = vector.broadcast %50 : vector<1x128xf32> to vector<48x128xf32>
    %52 = arith.addf %49, %51 : vector<48x128xf32>
    %cst_30 = arith.constant 0.000000e+00 : f32
    %53 = vector.shape_cast %10 : vector<48x1xi1> to vector<48x1xi1>
    %54 = vector.broadcast %53 : vector<48x1xi1> to vector<48x128xi1>
    %55 = vector.broadcast %cst_30 : f32 to vector<48x128xf32>
    %56 = arith.select %54, %52, %55 : vector<48x128xi1>, vector<48x128xf32>
    %57 = arith.addf %18, %56 : vector<48x128xf32>
    %cst_31 = arith.constant 0.000000e+00 : f32
    %58 = vector.broadcast %cst_31 : f32 to vector<48x128xf32>
    %59 = arith.cmpf ogt, %57, %58 : vector<48x128xf32>
    %cst_32 = arith.constant 0.00999999977 : f32
    %60 = vector.broadcast %cst_32 : f32 to vector<48x128xf32>
    %61 = arith.mulf %60, %57 : vector<48x128xf32>
    %62 = arith.select %59, %57, %61 : vector<48x128xi1>, vector<48x128xf32>
    %63 = arith.truncf %62 : vector<48x128xf32> to vector<48x128xbf16>
    %c11 = arith.constant 11 : index
    %c0_33 = arith.constant 0 : index
    %64 = vector.load %arg8[%c11, %c0_33] : memref<64x384xbf16, #tpu.memory_space<vmem>>, vector<48x128xbf16>
    tpu.vector_store %arg8[%c11, %c0_33], %63 {strides = array<i32>} : memref<64x384xbf16, #tpu.memory_space<vmem>>, vector<48x128xbf16>,
    %c8_34 = arith.constant 8 : index
    %c128_35 = arith.constant 128 : index
    %65 = vector.load %arg8[%c8_34, %c128_35] : memref<64x384xbf16, #tpu.memory_space<vmem>>, vector<48x128xbf16>
    tpu.vector_store %arg8[%c8_34, %c128_35], %63 {strides = array<i32>} : memref<64x384xbf16, #tpu.memory_space<vmem>>, vector<48x128xbf16>,
    %c5 = arith.constant 5 : index
    %c256_36 = arith.constant 256 : index
    %66 = vector.load %arg8[%c5, %c256_36] : memref<64x384xbf16, #tpu.memory_space<vmem>>, vector<48x128xbf16>
    tpu.vector_store %arg8[%c5, %c256_36], %63 {strides = array<i32>} : memref<64x384xbf16, #tpu.memory_space<vmem>>, vector<48x128xbf16>,
    %c8_37 = arith.constant 8 : index
    %c0_38 = arith.constant 0 : index
    %67 = vector.load %arg8[%c8_37, %c0_38] : memref<64x384xbf16, #tpu.memory_space<vmem>>, vector<48x384xbf16>
    %c768 = arith.constant 768 : index
    %c0_39 = arith.constant 0 : index
    %68 = vector.load %arg5[%c768, %c0_39] : memref<1536x128xbf16, #tpu.memory_space<vmem>>, vector<384x128xbf16>
    %cst_40 = arith.constant dense<0.000000e+00> : vector<48x128xf32>
    %69 = tpu.matmul %67, %68, %cst_40 {dimension_numbers = #tpu.dot_dimension_numbers<[1], [0], [0], [1], [0, 0, 1, 1], [], []>} : vector<48x384xbf16>, vector<384x128xbf16>, vector<48x128xf32> -> vector<48x128xf32>
    %c2 = arith.constant 2 : index
    %c0_41 = arith.constant 0 : index
    %70 = vector.load %arg6[%c2, %c0_41] : memref<4x128xf32, #tpu.memory_space<vmem>>, vector<1x128xf32>
    %71 = vector.broadcast %70 : vector<1x128xf32> to vector<48x128xf32>
    %72 = arith.addf %69, %71 : vector<48x128xf32>
    %cst_42 = arith.constant 0.000000e+00 : f32
    %73 = vector.shape_cast %10 : vector<48x1xi1> to vector<48x1xi1>
    %74 = vector.broadcast %73 : vector<48x1xi1> to vector<48x128xi1>
    %75 = vector.broadcast %cst_42 : f32 to vector<48x128xf32>
    %76 = arith.select %74, %72, %75 : vector<48x128xi1>, vector<48x128xf32>
    %cst_43 = arith.constant 0.000000e+00 : f32
    %77 = vector.broadcast %cst_43 : f32 to vector<48x128xf32>
    %78 = arith.cmpf ogt, %76, %77 : vector<48x128xf32>
    %cst_44 = arith.constant 0.00999999977 : f32
    %79 = vector.broadcast %cst_44 : f32 to vector<48x128xf32>
    %80 = arith.mulf %79, %76 : vector<48x128xf32>
    %81 = arith.select %78, %76, %80 : vector<48x128xi1>, vector<48x128xf32>
    %82 = arith.truncf %81 : vector<48x128xf32> to vector<48x128xbf16>
    %c9_45 = arith.constant 9 : index
    %c0_46 = arith.constant 0 : index
    %83 = vector.load %arg8[%c9_45, %c0_46] : memref<64x384xbf16, #tpu.memory_space<vmem>>, vector<48x128xbf16>
    tpu.vector_store %arg8[%c9_45, %c0_46], %82 {strides = array<i32>} : memref<64x384xbf16, #tpu.memory_space<vmem>>, vector<48x128xbf16>,
    %c8_47 = arith.constant 8 : index
    %c128_48 = arith.constant 128 : index
    %84 = vector.load %arg8[%c8_47, %c128_48] : memref<64x384xbf16, #tpu.memory_space<vmem>>, vector<48x128xbf16>
    tpu.vector_store %arg8[%c8_47, %c128_48], %82 {strides = array<i32>} : memref<64x384xbf16, #tpu.memory_space<vmem>>, vector<48x128xbf16>,
    %c7_49 = arith.constant 7 : index
    %c256_50 = arith.constant 256 : index
    %85 = vector.load %arg8[%c7_49, %c256_50] : memref<64x384xbf16, #tpu.memory_space<vmem>>, vector<48x128xbf16>
    tpu.vector_store %arg8[%c7_49, %c256_50], %82 {strides = array<i32>} : memref<64x384xbf16, #tpu.memory_space<vmem>>, vector<48x128xbf16>,
    %c8_51 = arith.constant 8 : index
    %c0_52 = arith.constant 0 : index
    %86 = vector.load %arg8[%c8_51, %c0_52] : memref<64x384xbf16, #tpu.memory_space<vmem>>, vector<48x384xbf16>
    %c1152 = arith.constant 1152 : index
    %c0_53 = arith.constant 0 : index
    %87 = vector.load %arg5[%c1152, %c0_53] : memref<1536x128xbf16, #tpu.memory_space<vmem>>, vector<384x128xbf16>
    %cst_54 = arith.constant dense<0.000000e+00> : vector<48x128xf32>
    %88 = tpu.matmul %86, %87, %cst_54 {dimension_numbers = #tpu.dot_dimension_numbers<[1], [0], [0], [1], [0, 0, 1, 1], [], []>} : vector<48x384xbf16>, vector<384x128xbf16>, vector<48x128xf32> -> vector<48x128xf32>
    %c3 = arith.constant 3 : index
    %c0_55 = arith.constant 0 : index
    %89 = vector.load %arg6[%c3, %c0_55] : memref<4x128xf32, #tpu.memory_space<vmem>>, vector<1x128xf32>
    %90 = vector.broadcast %89 : vector<1x128xf32> to vector<48x128xf32>
    %91 = arith.addf %88, %90 : vector<48x128xf32>
    %cst_56 = arith.constant 0.000000e+00 : f32
    %92 = vector.shape_cast %10 : vector<48x1xi1> to vector<48x1xi1>
    %93 = vector.broadcast %92 : vector<48x1xi1> to vector<48x128xi1>
    %94 = vector.broadcast %cst_56 : f32 to vector<48x128xf32>
    %95 = arith.select %93, %91, %94 : vector<48x128xi1>, vector<48x128xf32>
    %96 = arith.addf %57, %95 : vector<48x128xf32>
    %97 = vector.extract_strided_slice %96 {offsets = [8, 0], sizes = [32, 128], strides = [1, 1]} : vector<48x128xf32> to vector<32x128xf32>
    %98 = arith.truncf %97 : vector<32x128xf32> to vector<32x128xbf16>
    %c0_57 = arith.constant 0 : index
    %c0_58 = arith.constant 0 : index
    %c0_59 = arith.constant 0 : index
    %99 = vector.load %arg7[%c0_57, %c0_58, %c0_59] : memref<1x32x128xbf16, #tpu.memory_space<vmem>>, vector<1x32x128xbf16>
    %100 = vector.shape_cast %99 : vector<1x32x128xbf16> to vector<32x128xbf16>
    %101 = vector.shape_cast %98 : vector<32x128xbf16> to vector<1x32x128xbf16>
    tpu.vector_store %arg7[%c0_57, %c0_58, %c0_59], %101 {strides = array<i32>} : memref<1x32x128xbf16, #tpu.memory_space<vmem>>, vector<1x32x128xbf16>,
    return
  }
  func.func @transform_0(%arg0: i32, %arg1: i32) -> (i32, i32, i32) {
    %c1_i32 = arith.constant 1 : i32
    %0 = arith.addi %arg1, %c1_i32 : i32
    %c4_i32 = arith.constant 4 : i32
    %1 = arith.muli %0, %c4_i32 : i32
    %c1_i32_0 = arith.constant 1 : i32
    %2 = arith.subi %1, %c1_i32_0 : i32
    %c0_i32 = arith.constant 0 : i32
    %c0_i32_1 = arith.constant 0 : i32
    return %arg0, %2, %c0_i32 : i32, i32, i32
  }
  func.func @transform_1(%arg0: i32, %arg1: i32) -> (i32, i32, i32) {
    %c1_i32 = arith.constant 1 : i32
    %0 = arith.addi %arg1, %c1_i32 : i32
    %c0_i32 = arith.constant 0 : i32
    %c0_i32_0 = arith.constant 0 : i32
    return %arg0, %0, %c0_i32 : i32, i32, i32
  }
  func.func @transform_2(%arg0: i32, %arg1: i32) -> (i32, i32, i32) {
    %c2_i32 = arith.constant 2 : i32
    %0 = arith.addi %arg1, %c2_i32 : i32
    %c4_i32 = arith.constant 4 : i32
    %1 = arith.muli %0, %c4_i32 : i32
    %c0_i32 = arith.constant 0 : i32
    %c0_i32_0 = arith.constant 0 : i32
    return %arg0, %1, %c0_i32 : i32, i32, i32
  }
  func.func @transform_3(%arg0: i32, %arg1: i32) -> (i32, i32) {
    %c0_i32 = arith.constant 0 : i32
    %c0_i32_0 = arith.constant 0 : i32
    %c0_i32_1 = arith.constant 0 : i32
    return %c0_i32, %c0_i32_0 : i32, i32
  }
  func.func @transform_4(%arg0: i32, %arg1: i32) -> (i32, i32) {
    %c0_i32 = arith.constant 0 : i32
    %c0_i32_0 = arith.constant 0 : i32
    %c0_i32_1 = arith.constant 0 : i32
    return %c0_i32, %c0_i32_0 : i32, i32
  }
  func.func @transform_5(%arg0: i32, %arg1: i32) -> (i32, i32, i32) {
    %c0_i32 = arith.constant 0 : i32
    %c0_i32_0 = arith.constant 0 : i32
    return %arg0, %arg1, %c0_i32 : i32, i32, i32
  }
}

</mosaic_0001>

<llo_original>
// kernel: tpu_custom_call.1
$region0: #{tpu_custom_call.1}
  #allocation0 [shape = 'u32[]', space=smem, size = 0x4, offset = 0x4, fixed_abs, tag = 'smem constant byte address 0x4 - core index']
  #allocation1 [shape = 'u32[144,128]{1,0:T(1,128)}', space=vmem, size = 0x12000, scoped, tag = 'internal scratch']
  #allocation2 [shape = 'bf16[64,384]{1,0:T(8,128)(2,1)}', space=vmem, size = 0xc000, scoped, tag = 'scratch operand']
  %s0 = inlined_call_operand.hbm [shape: bf16[2,72,128], index: 0, kind: input, shape index: {}]
  %s1 = inlined_call_operand.hbm [shape: bf16[2,72,128], index: 1, kind: input, shape index: {}]
  %s2 = inlined_call_operand.hbm [shape: bf16[2,72,128], index: 2, kind: input, shape index: {}]
  %s3 = inlined_call_operand.hbm [shape: bf16[1536,128], index: 3, kind: input, shape index: {}]
  %s4 = inlined_call_operand.vmem [shape: f32[4,128], index: 4, kind: input, shape index: {}]
  %s5 = inlined_call_operand.hbm [shape: bf16[2,32,128], index: 5, kind: output, shape index: {}]
  %s6 = sld [smem:[#allocation0]]
  $region69: #{tpu_custom_call.1} parent=0
    _
  %s8 = ssub.s32 1, %s6
  %s9 = scalar_select 0, %s8, %s6
  $region1: #{tpu_custom_call.1} parent=0
    #allocation3 [shape = 'u8[4096]{0}', space=vmem, size = 0x1000, scoped, tag = 'input window, operand 0']
    #allocation4 [shape = 's32[2]{0}', space=sflag, size = 0x8, scoped, tag = 'scoped memory for tpu_custom_call.1']
    #allocation5 [shape = 's32[2]{0}', space=sflag, size = 0x8, scoped, tag = 'scoped memory for tpu_custom_call.1']
    #allocation6 [shape = 'u8[16384]{0}', space=vmem, size = 0x4000, scoped, tag = 'input window, operand 1']
    #allocation7 [shape = 's32[2]{0}', space=sflag, size = 0x8, scoped, tag = 'scoped memory for tpu_custom_call.1']
    #allocation8 [shape = 'u8[4096]{0}', space=vmem, size = 0x1000, scoped, tag = 'input window, operand 2']
    #allocation9 [shape = 'u8[393216]{0}', space=vmem, size = 0x60000, scoped, tag = 'input window, operand 3, single buffered']
    #allocation10 [shape = 's32[1]{0}', space=sflag, size = 0x4, scoped, tag = 'scoped memory for tpu_custom_call.1']
    #allocation11 [shape = 'u8[16384]{0}', space=vmem, size = 0x4000, scoped, tag = 'output window, operand 0']
    %10 = vsyncpa [#allocation4], 0
    %s11 = scalar_lea.sflag [#allocation4], 1
    %12 = vsyncpa %s11, 0
    %13 = vsyncpa [#allocation7], 0
    %s14 = scalar_lea.sflag [#allocation7], 1
    %15 = vsyncpa %s14, 0
    %16 = vsyncpa [#allocation10], 0
    %17 = vsyncpa [#allocation5], 0
    %s18 = scalar_lea.sflag [#allocation5], 1
    %19 = vsyncpa %s18, 0
    loop: start=0, step=1, limit=4
    $region2: #{tpu_custom_call.1} parent=1 // loop_pre_header
      _
    $region3: #{tpu_custom_call.1} parent=1 // loop_header
      %s21 = sphi 0, %s25
      %p22 = scmp.ge.s32.totalorder %s21, 4
      %s28 = sphi 0, %s40
      %s29 = sphi 0, %s36
      %s30 = sphi 0, %s28
      %s31 = sphi 0, %s29
      %s32 = sphi 0, %s30
      %s33 = sphi 0, %s31
      %s51 = sphi 0, %s53
      %s54 = sphi 0, %s51
      %s55 = sphi 0, %s54
      %s71 = sphi 0, %s55
      %s81 = sphi 0, %s83
      %s84 = sphi 0, %s81
      %s85 = sphi 0, %s84
      %s101 = sphi 0, %s85
      %s113 = sphi 0, %s115
      %s116 = sphi 0, %s113
      %s117 = sphi 0, %s116
      %s133 = sphi 0, %s117
      %s137 = sphi 0, %s137
      %s139 = sphi 0, %s137
      %s140 = sphi 0, %s139
      %s154 = sphi 0, %s140
      %s158 = sphi 0, %s158
      %s160 = sphi 0, %s158
      %s161 = sphi 0, %s160
      %s175 = sphi 0, %s161
      %s183 = sphi 0, %s185
      %s186 = sphi 0, %s183
      %s187 = sphi 0, %s186
      %s203 = sphi 0, %s187
    $region4: #{tpu_custom_call.1} parent=1 // loop_header_branch
      %24 = sbr.rel (%p22) target = $region8
    $region5: #{tpu_custom_call.1} parent=1 // loop_body
      %s26 = ssub.s32 %s21, 1
      %s27 = ssub.s32 %s21, 2
      %s34 = sadd.s32 1, %s29
      %p35 = scmp.ge.s32.totalorder %s34, 1
      %s36 = scalar_select %p35, 0, %s34
      %s37 = sadd.s32 1, %s28
      %s38 = scalar_select %p35, %s37, %s28
      %p39 = scmp.ge.s32.totalorder %s38, 2
      %s40 = scalar_select %p39, 0, %s38
      %s41 = sadd.s32 %s29, 1
      %s42 = smul.u32 %s41, 4
      %s43 = ssub.s32 %s42, 1
      %s44 = sadd.s32 %s36, 1
      %s45 = smul.u32 %s44, 4
      %s46 = ssub.s32 %s45, 1
      %s47 = ssub.s32 %s28, %s40
      %s48 = ssub.s32 %s43, %s46
      %s49 = sor.u32 %s47, %s48
      %p50 = scmp.eq.s32.totalorder %s49, 0
      %s52 = sadd.s32 %s51, 1
      %s53 = scalar_select %p50, %s51, %s52
      %p56 = pneg %p50
      %p57 = scmp.eq.s32.totalorder %s21, 1
      %p58 = por %p56, %p57
      %p59 = scmp.ne.s32.totalorder %s51, %s54
      %p60 = scmp.eq.s32.totalorder %s21, 0
      %p61 = por %p59, %p60
      %p62 = scmp.ne.s32.totalorder %s51, %s54
      %p63 = scmp.eq.s32.totalorder %s26, 1
      %p64 = por %p62, %p63
      %p65 = scmp.ne.s32.totalorder %s54, %s55
      %p66 = scmp.eq.s32.totalorder %s26, 0
      %p67 = por %p65, %p66
      %p68 = scmp.ne.s32.totalorder %s54, %s55
      %p69 = scmp.eq.s32.totalorder %s27, 1
      %p70 = por %p68, %p69
      %p72 = scmp.ne.s32.totalorder %s55, %s71
      %p73 = scmp.eq.s32.totalorder %s27, 0
      %p74 = por %p72, %p73
      %s75 = sadd.s32 %s29, 1
      %s76 = sadd.s32 %s36, 1
      %s77 = ssub.s32 %s28, %s40
      %s78 = ssub.s32 %s75, %s76
      %s79 = sor.u32 %s77, %s78
      %p80 = scmp.eq.s32.totalorder %s79, 0
      %s82 = sadd.s32 %s81, 1
      %s83 = scalar_select %p80, %s81, %s82
      %p86 = pneg %p80
      %p87 = scmp.eq.s32.totalorder %s21, 1
      %p88 = por %p86, %p87
      %p89 = scmp.ne.s32.totalorder %s81, %s84
      %p90 = scmp.eq.s32.totalorder %s21, 0
      %p91 = por %p89, %p90
      %p92 = scmp.ne.s32.totalorder %s81, %s84
      %p93 = scmp.eq.s32.totalorder %s26, 1
      %p94 = por %p92, %p93
      %p95 = scmp.ne.s32.totalorder %s84, %s85
      %p96 = scmp.eq.s32.totalorder %s26, 0
      %p97 = por %p95, %p96
      %p98 = scmp.ne.s32.totalorder %s84, %s85
      %p99 = scmp.eq.s32.totalorder %s27, 1
      %p100 = por %p98, %p99
      %p102 = scmp.ne.s32.totalorder %s85, %s101
      %p103 = scmp.eq.s32.totalorder %s27, 0
      %p104 = por %p102, %p103
      %s105 = sadd.s32 %s29, 2
      %s106 = smul.u32 %s105, 4
      %s107 = sadd.s32 %s36, 2
      %s108 = smul.u32 %s107, 4
      %s109 = ssub.s32 %s28, %s40
      %s110 = ssub.s32 %s106, %s108
      %s111 = sor.u32 %s109, %s110
      %p112 = scmp.eq.s32.totalorder %s111, 0
      %s114 = sadd.s32 %s113, 1
      %s115 = scalar_select %p112, %s113, %s114
      %p118 = pneg %p112
      %p119 = scmp.eq.s32.totalorder %s21, 1
      %p120 = por %p118, %p119
      %p121 = scmp.ne.s32.totalorder %s113, %s116
      %p122 = scmp.eq.s32.totalorder %s21, 0
      %p123 = por %p121, %p122
      %p124 = scmp.ne.s32.totalorder %s113, %s116
      %p125 = scmp.eq.s32.totalorder %s26, 1
      %p126 = por %p124, %p125
      %p127 = scmp.ne.s32.totalorder %s116, %s117
      %p128 = scmp.eq.s32.totalorder %s26, 0
      %p129 = por %p127, %p128
      %p130 = scmp.ne.s32.totalorder %s116, %s117
      %p131 = scmp.eq.s32.totalorder %s27, 1
      %p132 = por %p130, %p131
      %p134 = scmp.ne.s32.totalorder %s117, %s133
      %p135 = scmp.eq.s32.totalorder %s27, 0
      %p136 = por %p134, %p135
      %s138 = sadd.s32 %s137, 1
      %p141 = scmp.eq.s32.totalorder %s21, 1
      %p142 = scmp.ne.s32.totalorder %s137, %s139
      %p143 = scmp.eq.s32.totalorder %s21, 0
      %p144 = por %p142, %p143
      %p145 = scmp.ne.s32.totalorder %s137, %s139
      %p146 = scmp.eq.s32.totalorder %s26, 1
      %p147 = por %p145, %p146
      %p148 = scmp.ne.s32.totalorder %s139, %s140
      %p149 = scmp.eq.s32.totalorder %s26, 0
      %p150 = por %p148, %p149
      %p151 = scmp.ne.s32.totalorder %s139, %s140
      %p152 = scmp.eq.s32.totalorder %s27, 1
      %p153 = por %p151, %p152
      %p155 = scmp.ne.s32.totalorder %s140, %s154
      %p156 = scmp.eq.s32.totalorder %s27, 0
      %p157 = por %p155, %p156
      %s159 = sadd.s32 %s158, 1
      %p162 = scmp.eq.s32.totalorder %s21, 1
      %p163 = scmp.ne.s32.totalorder %s158, %s160
      %p164 = scmp.eq.s32.totalorder %s21, 0
      %p165 = por %p163, %p164
      %p166 = scmp.ne.s32.totalorder %s158, %s160
      %p167 = scmp.eq.s32.totalorder %s26, 1
      %p168 = por %p166, %p167
      %p169 = scmp.ne.s32.totalorder %s160, %s161
      %p170 = scmp.eq.s32.totalorder %s26, 0
      %p171 = por %p169, %p170
      %p172 = scmp.ne.s32.totalorder %s160, %s161
      %p173 = scmp.eq.s32.totalorder %s27, 1
      %p174 = por %p172, %p173
      %p176 = scmp.ne.s32.totalorder %s161, %s175
      %p177 = scmp.eq.s32.totalorder %s27, 0
      %p178 = por %p176, %p177
      %s179 = ssub.s32 %s28, %s40
      %s180 = ssub.s32 %s29, %s36
      %s181 = sor.u32 %s179, %s180
      %p182 = scmp.eq.s32.totalorder %s181, 0
      %s184 = sadd.s32 %s183, 1
      %s185 = scalar_select %p182, %s183, %s184
      %p188 = pneg %p182
      %p189 = scmp.eq.s32.totalorder %s21, 1
      %p190 = por %p188, %p189
      %p191 = scmp.ne.s32.totalorder %s183, %s186
      %p192 = scmp.eq.s32.totalorder %s21, 0
      %p193 = por %p191, %p192
      %p194 = scmp.ne.s32.totalorder %s183, %s186
      %p195 = scmp.eq.s32.totalorder %s26, 1
      %p196 = por %p194, %p195
      %p197 = scmp.ne.s32.totalorder %s186, %s187
      %p198 = scmp.eq.s32.totalorder %s26, 0
      %p199 = por %p197, %p198
      %p200 = scmp.ne.s32.totalorder %s186, %s187
      %p201 = scmp.eq.s32.totalorder %s27, 1
      %p202 = por %p200, %p201
      %p204 = scmp.ne.s32.totalorder %s187, %s203
      %p205 = scmp.eq.s32.totalorder %s27, 0
      %p206 = por %p204, %p205
      %p207 = scmp.le.s32.totalorder 1, %s21
      %p208 = scmp.lt.s32.totalorder %s21, 3
      %p209 = pnand %p207, %p208
      %p210 = pneg %p209
      // Predicated region
      $region9: #{tpu_custom_call.1} parent=5 // pred_check
        _
      $region10: #{tpu_custom_call.1} parent=5 // pred_check_branch
        %212 = sbr.rel (%p209) target = $region12
      $region11: #{tpu_custom_call.1} parent=5 // pred_region
        %s213 = ssub.s32 %s21, 1
        // Predicated region
        $region13: #{tpu_custom_call.1} parent=11 // pred_check
          %p214 = pneg %p150
        $region14: #{tpu_custom_call.1} parent=11 // pred_check_branch
          %216 = sbr.rel (%p214) target = $region16
        $region15: #{tpu_custom_call.1} parent=11 // pred_region
          %s218 = ssub.s32 12288, 12288
          %219 = vsyncadd [#allocation10], %s218
          %s220 = sshll.u32 [#allocation9], 4
          %s221 = int_to_ptr.vmem [resolvable:$true] %s220
          %226 = dma.hbm_to_vmem [thread:$0]  %s3, 12288, %s221, [#allocation10], 64, 64, 4
        $region16: #{tpu_custom_call.1} parent=11 // pred_fallthru
          _
        // Predicated region
        $region17: #{tpu_custom_call.1} parent=11 // pred_check
          %p227 = pneg %p171
        $region18: #{tpu_custom_call.1} parent=11 // pred_check_branch
          %229 = sbr.rel (%p227) target = $region20
        $region19: #{tpu_custom_call.1} parent=11 // pred_region
          _
        $region20: #{tpu_custom_call.1} parent=11 // pred_fallthru
          _
      $region12: #{tpu_custom_call.1} parent=5 // pred_fallthru
        _
      %p230 = scmp.lt.s32.totalorder %s21, 2
      // Predicated region
      $region21: #{tpu_custom_call.1} parent=5 // pred_check
        %p231 = pneg %p230
      $region22: #{tpu_custom_call.1} parent=5 // pred_check_branch
        %233 = sbr.rel (%p231) target = $region24
      $region23: #{tpu_custom_call.1} parent=5 // pred_region
        // Predicated region
        $region25: #{tpu_custom_call.1} parent=23 // pred_check
          %p234 = pneg %p61
        $region26: #{tpu_custom_call.1} parent=23 // pred_check_branch
          %236 = sbr.rel (%p234) target = $region28
        $region27: #{tpu_custom_call.1} parent=23 // pred_region
          %s237 = sand.u32 %s51, 1
          %s238 = scalar_lea.sflag [#allocation4], %s237
          %s239 = sand.u32 %s51, 1
          %s240 = smul.addr %s239, 4
          %s241 = scalar_lea.vmem [#allocation3], %s240
          %s242 = sadd.s32 %s29, 1
          %s243 = smul.u32 %s242, 4
          %s244 = ssub.s32 %s243, 1
          %s246 = ssub.s32 64, 64
          %247 = vsyncadd %s238, %s246
          %s248 = smul.addr %s28, 9
          %s249 = sadd.s32 %s244, %s248
          %s250 = smul.addr %s249, 64
          %s251 = scalar_lea.hbm %s0, %s250
          %s253 = sshll.u32 %s241, 4
          %s254 = int_to_ptr.vmem [resolvable:$true] %s253
          %256 = dma.hbm_to_vmem [thread:$0]  %s251, 64, %s254, %s238
        $region28: #{tpu_custom_call.1} parent=23 // pred_fallthru
          _
        // Predicated region
        $region29: #{tpu_custom_call.1} parent=23 // pred_check
          %p257 = pneg %p91
        $region30: #{tpu_custom_call.1} parent=23 // pred_check_branch
          %259 = sbr.rel (%p257) target = $region32
        $region31: #{tpu_custom_call.1} parent=23 // pred_region
          %s260 = sand.u32 %s21, 1
          %s261 = scalar_lea.sflag [#allocation7], %s260
          %s262 = sand.u32 %s81, 1
          %s263 = smul.addr %s262, 16
          %s264 = scalar_lea.vmem [#allocation6], %s263
          %s265 = sadd.s32 %s29, 1
          %s266 = smul.u32 4, %s265
          %s267 = ssub.s32 9, %s266
          %p268 = scmp.lt.s32.totalorder %s267, 4
          %s269 = scalar_select %p268, %s267, 4
          %s270 = smul.u32 64, %s269
          %s272 = ssub.s32 256, %s270
          %273 = vsyncadd %s261, %s272
          %p274 = scmp.ne.s32.totalorder 0, %s270
          %s275 = smul.addr %s28, 9
          %s276 = sadd.s32 %s266, %s275
          %s277 = smul.addr %s276, 64
          %s278 = scalar_lea.hbm %s1, %s277
          %s279 = smul.u32 4, %s269
          %s280 = sshll.u32 %s264, 4
          %s281 = int_to_ptr.vmem [resolvable:$true] %s280
          %s282 = sshll.u32 %s279, 4
          %286 = dma.hbm_to_vmem [thread:$0]  (%p274), %s278, %s282, %s281, %s261, 64, 64, 4
        $region32: #{tpu_custom_call.1} parent=23 // pred_fallthru
          _
        // Predicated region
        $region33: #{tpu_custom_call.1} parent=23 // pred_check
          %p287 = pneg %p123
        $region34: #{tpu_custom_call.1} parent=23 // pred_check_branch
          %289 = sbr.rel (%p287) target = $region36
        $region35: #{tpu_custom_call.1} parent=23 // pred_region
          %s290 = sand.u32 %s21, 1
          %s291 = scalar_lea.sflag [#allocation7], %s290
          %s292 = sand.u32 %s113, 1
          %s293 = smul.addr %s292, 4
          %s294 = scalar_lea.vmem [#allocation8], %s293
          %s295 = sadd.s32 %s29, 2
          %s296 = smul.u32 %s295, 4
          %s298 = ssub.s32 64, 64
          %299 = vsyncadd %s291, %s298
          %s300 = smul.addr %s28, 9
          %s301 = sadd.s32 %s296, %s300
          %s302 = smul.addr %s301, 64
          %s303 = scalar_lea.hbm %s2, %s302
          %s305 = sshll.u32 %s294, 4
          %s306 = int_to_ptr.vmem [resolvable:$true] %s305
          %308 = dma.hbm_to_vmem [thread:$0]  %s303, 64, %s306, %s291
        $region36: #{tpu_custom_call.1} parent=23 // pred_fallthru
          _
      $region24: #{tpu_custom_call.1} parent=5 // pred_fallthru
        _
      %p309 = scmp.le.s32.totalorder 1, %s21
      %p310 = scmp.lt.s32.totalorder %s21, 3
      %p311 = pnand %p309, %p310
      %p312 = pneg %p311
      // Predicated region
      $region37: #{tpu_custom_call.1} parent=5 // pred_check
        _
      $region38: #{tpu_custom_call.1} parent=5 // pred_check_branch
        %314 = sbr.rel (%p311) target = $region40
      $region39: #{tpu_custom_call.1} parent=5 // pred_region
        %s315 = ssub.s32 %s21, 1
        %s316 = sand.u32 %s54, 1
        %s317 = scalar_lea.sflag [#allocation4], %s316
        %s318 = sand.u32 %s54, 1
        %s319 = smul.addr %s318, 4
        %s320 = scalar_lea.vmem [#allocation3], %s319
        // Predicated region
        $region41: #{tpu_custom_call.1} parent=39 // pred_check
          %p321 = pneg %p67
        $region42: #{tpu_custom_call.1} parent=39 // pred_check_branch
          %323 = sbr.rel (%p321) target = $region44
        $region43: #{tpu_custom_call.1} parent=39 // pred_region
          %324 = dma.done %s317, 64
        $region44: #{tpu_custom_call.1} parent=39 // pred_fallthru
          _
        %s325 = sand.u32 %s26, 1
        %s326 = scalar_lea.sflag [#allocation7], %s325
        %s327 = sand.u32 %s84, 1
        %s328 = smul.addr %s327, 16
        %s329 = scalar_lea.vmem [#allocation6], %s328
        // Predicated region
        $region45: #{tpu_custom_call.1} parent=39 // pred_check
          %p330 = pneg %p97
        $region46: #{tpu_custom_call.1} parent=39 // pred_check_branch
          %332 = sbr.rel (%p330) target = $region48
        $region47: #{tpu_custom_call.1} parent=39 // pred_region
          %333 = dma.done %s326, 256
        $region48: #{tpu_custom_call.1} parent=39 // pred_fallthru
          _
        %s334 = sand.u32 %s26, 1
        %s335 = scalar_lea.sflag [#allocation7], %s334
        %s336 = sand.u32 %s116, 1
        %s337 = smul.addr %s336, 4
        %s338 = scalar_lea.vmem [#allocation8], %s337
        // Predicated region
        $region49: #{tpu_custom_call.1} parent=39 // pred_check
          %p339 = pneg %p129
        $region50: #{tpu_custom_call.1} parent=39 // pred_check_branch
          %341 = sbr.rel (%p339) target = $region52
        $region51: #{tpu_custom_call.1} parent=39 // pred_region
          %342 = dma.done %s335, 64
        $region52: #{tpu_custom_call.1} parent=39 // pred_fallthru
          _
        // Predicated region
        $region53: #{tpu_custom_call.1} parent=39 // pred_check
          %p343 = pneg %p150
        $region54: #{tpu_custom_call.1} parent=39 // pred_check_branch
          %345 = sbr.rel (%p343) target = $region56
        $region55: #{tpu_custom_call.1} parent=39 // pred_region
          %346 = dma.done [#allocation10], 12288
        $region56: #{tpu_custom_call.1} parent=39 // pred_fallthru
          _
        %s347 = sand.u32 %s54, 1
        %s348 = scalar_lea.sflag [#allocation4], %s347
        %s349 = sand.u32 %s54, 1
        %s350 = smul.addr %s349, 4
        %s351 = scalar_lea.vmem [#allocation3], %s350
        %p352 = pneg %p67
        %p353 = pneg %p64
        %s354 = sand.u32 %s26, 1
        %s355 = scalar_lea.sflag [#allocation7], %s354
        %s356 = sand.u32 %s84, 1
        %s357 = smul.addr %s356, 16
        %s358 = scalar_lea.vmem [#allocation6], %s357
        %p359 = pneg %p97
        %p360 = pneg %p94
        %s361 = sand.u32 %s26, 1
        %s362 = scalar_lea.sflag [#allocation7], %s361
        %s363 = sand.u32 %s116, 1
        %s364 = smul.addr %s363, 4
        %s365 = scalar_lea.vmem [#allocation8], %s364
        %p366 = pneg %p129
        %p367 = pneg %p126
        %p368 = pneg %p150
        %p369 = pneg %p147
        %p370 = pneg %p171
        %p371 = pneg %p168
        %p372 = pneg %p199
        %p373 = pneg %p196
        %s374 = sand.u32 %s186, 1
        %s375 = scalar_lea.sflag [#allocation5], %s374
        %s376 = sand.u32 %s186, 1
        %s377 = smul.addr %s376, 16
        %s378 = scalar_lea.vmem [#allocation11], %s377
        %s379 = sadd.s32 %s31, 1
        %s380 = smul.u32 %s379, 4
        %s381 = ssub.s32 %s380, 1
        %s382 = sadd.s32 %s31, 1
        %s383 = smul.u32 4, %s382
        %s384 = ssub.s32 9, %s383
        %p385 = scmp.lt.s32.totalorder %s384, 4
        %s386 = scalar_select %p385, %s384, 4
        %s387 = smul.u32 64, %s386
        %s388 = sadd.s32 %s31, 2
        %s389 = smul.u32 %s388, 4
        %s390 = smul.u32 4, %s31
        %v392 = vlaneseq
        %v393 = vshrl.u32 %v392, 7
        %v394 = vadd.s32 %v393, 8
        %v395 = vadd.s32 %v393, 16
        %v396 = vadd.s32 %v393, 24
        %v397 = vadd.s32 %v393, 32
        %v398 = vadd.s32 %v393, 40
        %s399 = smul.u32 %s31, 32
        %v400 = vstv %s399
        %v401 = vadd.s32 %v400, %v393
        %v402 = vadd.s32 %v400, %v394
        %v403 = vadd.s32 %v400, %v395
        %v404 = vadd.s32 %v400, %v396
        %v405 = vadd.s32 %v400, %v397
        %v406 = vadd.s32 %v400, %v398
        %v407 = vsub.s32 %v401, 8
        %v408 = vsub.s32 %v402, 8
        %v409 = vsub.s32 %v403, 8
        %v410 = vsub.s32 %v404, 8
        %v411 = vsub.s32 %v405, 8
        %v412 = vsub.s32 %v406, 8
        %vm413 = vcmp.ge.s32.totalorder %v407, 0
        %vm414 = vcmp.ge.s32.totalorder %v408, 0
        %vm415 = vcmp.ge.s32.totalorder %v409, 0
        %vm416 = vcmp.ge.s32.totalorder %v410, 0
        %vm417 = vcmp.ge.s32.totalorder %v411, 0
        %vm418 = vcmp.ge.s32.totalorder %v412, 0
        %vm419 = vcmp.lt.s32.totalorder %v407, 32
        %vm420 = vcmp.lt.s32.totalorder %v408, 32
        %vm421 = vcmp.lt.s32.totalorder %v409, 32
        %vm422 = vcmp.lt.s32.totalorder %v410, 32
        %vm423 = vcmp.lt.s32.totalorder %v411, 32
        %vm424 = vcmp.lt.s32.totalorder %v412, 32
        %vm425 = vmand %vm413, %vm419
        %vm426 = vmand %vm414, %vm420
        %vm427 = vmand %vm415, %vm421
        %vm428 = vmand %vm416, %vm422
        %vm429 = vmand %vm417, %vm423
        %vm430 = vmand %vm418, %vm424
        %v431 = vld [vmem:[%s320] sm:$0xf]
        %v432 = vld [vmem:[%s329] sm:$0xf]
        %v433 = vld [vmem:[%s329 + $0x4] sm:$0xf]
        %v434 = vld [vmem:[%s329 + $0x8] sm:$0xf]
        %v435 = vld [vmem:[%s329 + $0xc] sm:$0xf]
        %v436 = vld [vmem:[%s338] sm:$0xf]
        %v441 = vunpack.c.l.b16 %v432
        %v442 = vunpack.c.l.b16 %v433
        %v443 = vunpack.c.l.b16 %v434
        %v444 = vunpack.c.l.b16 %v435
        %v445 = vpack.c.b16 %v441, %v441
        %v446 = vpack.c.b16 %v443, %v442
        %v447 = vpack.c.b16 %v444, %v444
        %v450 = vunpack.c.l.b16 %v436
        %v451 = vpack.c.b16 %v450, %v450
        %vm452 = vcmask 1043456
        %v455 = vsel %vm452, %v431, %v445
        %v459 = vsel %vm452, %v447, %v451
        %v461 = vunpack.c.l.bf16 %v455
        %v462 = vunpack.c.h.bf16 %v455
        %v463 = vunpack.c.l.bf16 %v446
        %v464 = vunpack.c.h.bf16 %v446
        %v465 = vunpack.c.l.bf16 %v459
        %v466 = vunpack.c.h.bf16 %v459
        %vm467 = vcmp.gt.f32.partialorder %v461, 0.0
        %vm468 = vcmp.gt.f32.partialorder %v462, 0.0
        %vm469 = vcmp.gt.f32.partialorder %v463, 0.0
        %vm470 = vcmp.gt.f32.partialorder %v464, 0.0
        %vm471 = vcmp.gt.f32.partialorder %v465, 0.0
        %vm472 = vcmp.gt.f32.partialorder %v466, 0.0
        %v473 = vmul.f32 %v461, 0.01
        %v474 = vmul.f32 %v462, 0.01
        %v475 = vmul.f32 %v463, 0.01
        %v476 = vmul.f32 %v464, 0.01
        %v477 = vmul.f32 %v465, 0.01
        %v478 = vmul.f32 %v466, 0.01
        %v479 = vsel %vm467, %v461, %v473
        %v480 = vsel %vm468, %v462, %v474
        %v481 = vsel %vm469, %v463, %v475
        %v482 = vsel %vm470, %v464, %v476
        %v483 = vsel %vm471, %v465, %v477
        %v484 = vsel %vm472, %v466, %v478
        %v485 = vpack.c.bf16 %v480, %v479
        %v486 = vpack.c.bf16 %v482, %v481
        %v487 = vpack.c.bf16 %v484, %v483
        %v491 = vunpack.c.l.b16 %v485
        %v492 = vunpack.c.h.b16 %v485
        %v493 = vunpack.c.l.b16 %v486
        %v494 = vunpack.c.h.b16 %v486
        %v495 = vunpack.c.l.b16 %v487
        %v496 = vunpack.c.h.b16 %v487
        %v497 = vpack.c.b16 %v491, %v491
        %v498 = vpack.c.b16 %v492, %v492
        %v499 = vpack.c.b16 %v493, %v493
        %v500 = vpack.c.b16 %v494, %v494
        %v501 = vpack.c.b16 %v495, %v495
        %v502 = vpack.c.b16 %v496, %v496
        %vm503 = vsmask.f32 256
        %vm504 = vsmask.f32 4368
        %vm505 = vmor %vm503, %vm504
        %v507 = vshrl.u32 %v497, 16
        %v509 = vrot.slane %v507, 7
        %v510 = vshll.u32 %v497, 16
        %v512 = vor.u32 %v509, %v510
        %v513 = vrot.slane %v509, 4
        %v515 = vshrl.u32 %v498, 16
        %v517 = vrot.slane %v515, 7
        %v518 = vshll.u32 %v498, 16
        %v520 = vor.u32 %v517, %v518
        %v521 = vsel %vm505, %v513, %v520
        %v522 = vrot.slane %v517, 4
        %v524 = vshrl.u32 %v499, 16
        %v526 = vrot.slane %v524, 7
        %v527 = vshll.u32 %v499, 16
        %v529 = vor.u32 %v526, %v527
        %v530 = vsel %vm505, %v522, %v529
        %v531 = vrot.slane %v526, 4
        %v533 = vshrl.u32 %v500, 16
        %v535 = vrot.slane %v533, 7
        %v536 = vshll.u32 %v500, 16
        %v538 = vor.u32 %v535, %v536
        %v539 = vsel %vm505, %v531, %v538
        %v540 = vrot.slane %v535, 4
        %v542 = vshrl.u32 %v501, 16
        %v544 = vrot.slane %v542, 7
        %v545 = vshll.u32 %v501, 16
        %v547 = vor.u32 %v544, %v545
        %v548 = vsel %vm505, %v540, %v547
        %v549 = vrot.slane %v544, 4
        %v551 = vshrl.u32 %v502, 16
        %v553 = vrot.slane %v551, 7
        %v554 = vshll.u32 %v502, 16
        %v556 = vor.u32 %v553, %v554
        %v557 = vsel %vm505, %v549, %v556
        %v558 = vrot.slane %v553, 4
        %vm566 = vcmask 1043456
        %vm567 = vsmask.f32 7938
        %vm568 = vmand %vm566, %vm567
        %v569 = vld [vmem:[#allocation2 + $0xc] sm:$0xf]
        %v570 = vsel %vm568, %v512, %v569
        %571 = vst [vmem:[#allocation2 + $0xc] sm:$0xf] %v570
        %572 = vst [vmem:[#allocation2 + $0x18] sm:$0xf] %v521
        %573 = vst [vmem:[#allocation2 + $0x24] sm:$0xf] %v530
        %574 = vst [vmem:[#allocation2 + $0x30] sm:$0xf] %v539
        %575 = vst [vmem:[#allocation2 + $0x3c] sm:$0xf] %v548
        %576 = vst [vmem:[#allocation2 + $0x48] sm:$0xf] %v557
        %vm577 = vcmask 1040384
        %vm578 = vmand %vm577, %vm503
        %v579 = vld [vmem:[#allocation2 + $0x54] sm:$0x1]
        %v580 = vsel %vm578, %v558, %v579
        %581 = vst [vmem:[#allocation2 + $0x54] sm:$0x1] %v580
        %588 = vst [vmem:[#allocation2 + $0x10] sm:$0xf] %v497
        %589 = vst [vmem:[#allocation2 + $0x1c] sm:$0xf] %v498
        %590 = vst [vmem:[#allocation2 + $0x28] sm:$0xf] %v499
        %591 = vst [vmem:[#allocation2 + $0x34] sm:$0xf] %v500
        %592 = vst [vmem:[#allocation2 + $0x40] sm:$0xf] %v501
        %593 = vst [vmem:[#allocation2 + $0x4c] sm:$0xf] %v502
        %vm594 = vsmask.f32 3328
        %vm595 = vsmask.f32 7440
        %vm596 = vmor %vm594, %vm595
        %v597 = vrot.slane %v510, 5
        %v598 = vrot.slane %v507, 4
        %v599 = vor.u32 %v598, %v597
        %v600 = vrot.slane %v599, 4
        %v601 = vrot.slane %v518, 5
        %v602 = vsel %vm596, %v600, %v601
        %v603 = vrot.slane %v515, 4
        %v604 = vor.u32 %v603, %v601
        %v605 = vrot.slane %v604, 4
        %v606 = vrot.slane %v527, 5
        %v607 = vsel %vm596, %v605, %v606
        %v608 = vrot.slane %v524, 4
        %v609 = vor.u32 %v608, %v606
        %v610 = vrot.slane %v609, 4
        %v611 = vrot.slane %v536, 5
        %v612 = vsel %vm596, %v610, %v611
        %v613 = vrot.slane %v533, 4
        %v614 = vor.u32 %v613, %v611
        %v615 = vrot.slane %v614, 4
        %v616 = vrot.slane %v545, 5
        %v617 = vsel %vm596, %v615, %v616
        %v618 = vrot.slane %v542, 4
        %v619 = vor.u32 %v618, %v616
        %v620 = vrot.slane %v619, 4
        %v621 = vrot.slane %v554, 5
        %v622 = vsel %vm596, %v620, %v621
        %v623 = vrot.slane %v551, 4
        %v624 = vor.u32 %v623, %v621
        %v625 = vrot.slane %v624, 4
        %vm633 = vcmask 1043459
        %vm634 = vsmask.f32 7950
        %vm635 = vmand %vm633, %vm634
        %v636 = vld [vmem:[#allocation2 + $0x8] sm:$0x8]
        %v637 = vsel %vm635, %v597, %v636
        %638 = vst [vmem:[#allocation2 + $0x8] sm:$0x8] %v637
        %639 = vst [vmem:[#allocation2 + $0x14] sm:$0xf] %v602
        %640 = vst [vmem:[#allocation2 + $0x20] sm:$0xf] %v607
        %641 = vst [vmem:[#allocation2 + $0x2c] sm:$0xf] %v612
        %642 = vst [vmem:[#allocation2 + $0x38] sm:$0xf] %v617
        %643 = vst [vmem:[#allocation2 + $0x44] sm:$0xf] %v622
        %vm644 = vmand %vm566, %vm594
        %v645 = vld [vmem:[#allocation2 + $0x50] sm:$0xf]
        %v646 = vsel %vm644, %v625, %v645
        %647 = vst [vmem:[#allocation2 + $0x50] sm:$0xf] %v646
        %v648 = vld [vmem:[#allocation2 + $0xc] sm:$0xff]
        %v649 = vld [vmem:[#allocation2 + $0x14] sm:$0xf]
        %v650 = vld [vmem:[#allocation2 + $0x18] sm:$0xff]
        %v651 = vld [vmem:[#allocation2 + $0x20] sm:$0xf]
        %v652 = vld [vmem:[#allocation2 + $0x24] sm:$0xff]
        %v653 = vld [vmem:[#allocation2 + $0x2c] sm:$0xf]
        %v654 = vld [vmem:[#allocation2 + $0x30] sm:$0xff]
        %v655 = vld [vmem:[#allocation2 + $0x38] sm:$0xf]
        %v656 = vld [vmem:[#allocation2 + $0x3c] sm:$0xff]
        %v657 = vld [vmem:[#allocation2 + $0x44] sm:$0xf]
        %v658 = vld [vmem:[#allocation2 + $0x48] sm:$0xff]
        %v659 = vld [vmem:[#allocation2 + $0x50] sm:$0xf]
        %v660 = vld [vmem:[#allocation9] sm:$0xf]
        %v661 = vld [vmem:[#allocation9 + $0x4] sm:$0xf]
        %v662 = vld [vmem:[#allocation9 + $0x8] sm:$0xf]
        %v663 = vld [vmem:[#allocation9 + $0xc] sm:$0xf]
        %v664 = vld [vmem:[#allocation9 + $0x10] sm:$0xf]
        %v665 = vld [vmem:[#allocation9 + $0x14] sm:$0xf]
        %v666 = vld [vmem:[#allocation9 + $0x18] sm:$0xf]
        %v667 = vld [vmem:[#allocation9 + $0x1c] sm:$0xf]
        %v668 = vld [vmem:[#allocation9 + $0x20] sm:$0xf]
        %v669 = vld [vmem:[#allocation9 + $0x24] sm:$0xf]
        %v670 = vld [vmem:[#allocation9 + $0x28] sm:$0xf]
        %v671 = vld [vmem:[#allocation9 + $0x2c] sm:$0xf]
        %v672 = vld [vmem:[#allocation9 + $0x30] sm:$0xf]
        %v673 = vld [vmem:[#allocation9 + $0x34] sm:$0xf]
        %v674 = vld [vmem:[#allocation9 + $0x38] sm:$0xf]
        %v675 = vld [vmem:[#allocation9 + $0x3c] sm:$0xf]
        %v676 = vld [vmem:[#allocation9 + $0x40] sm:$0xf]
        %v677 = vld [vmem:[#allocation9 + $0x44] sm:$0xf]
        %v678 = vld [vmem:[#allocation9 + $0x48] sm:$0xf]
        %v679 = vld [vmem:[#allocation9 + $0x4c] sm:$0xf]
        %v680 = vld [vmem:[#allocation9 + $0x50] sm:$0xf]
        %v681 = vld [vmem:[#allocation9 + $0x54] sm:$0xf]
        %v682 = vld [vmem:[#allocation9 + $0x58] sm:$0xf]
        %v683 = vld [vmem:[#allocation9 + $0x5c] sm:$0xf]
        %v684 = vld [vmem:[#allocation9 + $0x60] sm:$0xf]
        %v685 = vld [vmem:[#allocation9 + $0x64] sm:$0xf]
        %v686 = vld [vmem:[#allocation9 + $0x68] sm:$0xf]
        %v687 = vld [vmem:[#allocation9 + $0x6c] sm:$0xf]
        %v688 = vld [vmem:[#allocation9 + $0x70] sm:$0xf]
        %v689 = vld [vmem:[#allocation9 + $0x74] sm:$0xf]
        %v690 = vld [vmem:[#allocation9 + $0x78] sm:$0xf]
        %v691 = vld [vmem:[#allocation9 + $0x7c] sm:$0xf]
        %v692 = vld [vmem:[#allocation9 + $0x80] sm:$0xf]
        %v693 = vld [vmem:[#allocation9 + $0x84] sm:$0xf]
        %v694 = vld [vmem:[#allocation9 + $0x88] sm:$0xf]
        %v695 = vld [vmem:[#allocation9 + $0x8c] sm:$0xf]
        %v696 = vld [vmem:[#allocation9 + $0x90] sm:$0xf]
        %v697 = vld [vmem:[#allocation9 + $0x94] sm:$0xf]
        %v698 = vld [vmem:[#allocation9 + $0x98] sm:$0xf]
        %v699 = vld [vmem:[#allocation9 + $0x9c] sm:$0xf]
        %v700 = vld [vmem:[#allocation9 + $0xa0] sm:$0xf]
        %v701 = vld [vmem:[#allocation9 + $0xa4] sm:$0xf]
        %v702 = vld [vmem:[#allocation9 + $0xa8] sm:$0xf]
        %v703 = vld [vmem:[#allocation9 + $0xac] sm:$0xf]
        %v704 = vld [vmem:[#allocation9 + $0xb0] sm:$0xf]
        %v705 = vld [vmem:[#allocation9 + $0xb4] sm:$0xf]
        %v706 = vld [vmem:[#allocation9 + $0xb8] sm:$0xf]
        %v707 = vld [vmem:[#allocation9 + $0xbc] sm:$0xf]
        %v708 = vld [vmem:[%s4] sm:$0x1]
        %v709 = vlaneseq
        %v710 = vshrl.u32 %v709, 7
        %v711 = vsub.s32 0, %v710
        %v712 = vrot.slane %v708, %v711
        %v725 = vunpack.c.l.b16 %v648
        %v726 = vunpack.c.h.b16 %v648
        %v727 = vunpack.c.l.b16 %v649
        %v728 = vunpack.c.l.b16 %v650
        %v729 = vunpack.c.h.b16 %v650
        %v730 = vunpack.c.l.b16 %v651
        %v731 = vunpack.c.l.b16 %v652
        %v732 = vunpack.c.h.b16 %v652
        %v733 = vunpack.c.l.b16 %v653
        %v734 = vunpack.c.l.b16 %v654
        %v735 = vunpack.c.h.b16 %v654
        %v736 = vunpack.c.l.b16 %v655
        %v737 = vunpack.c.l.b16 %v656
        %v738 = vunpack.c.h.b16 %v656
        %v739 = vunpack.c.l.b16 %v657
        %v740 = vunpack.c.l.b16 %v658
        %v741 = vunpack.c.h.b16 %v658
        %v742 = vunpack.c.l.b16 %v659
        %v743 = vpack.c.b16 %v728, %v725
        %v744 = vpack.c.b16 %v729, %v726
        %v745 = vpack.c.b16 %v730, %v727
        %v746 = vpack.c.b16 %v734, %v731
        %v747 = vpack.c.b16 %v735, %v732
        %v748 = vpack.c.b16 %v736, %v733
        %v749 = vpack.c.b16 %v740, %v737
        %v750 = vpack.c.b16 %v741, %v738
        %v751 = vpack.c.b16 %v742, %v739
        %v809 = vunpack.c.l.b16 %v660
        %v810 = vunpack.c.l.b16 %v661
        %v811 = vunpack.c.l.b16 %v662
        %v812 = vunpack.c.l.b16 %v663
        %v813 = vunpack.c.l.b16 %v664
        %v814 = vunpack.c.l.b16 %v665
        %v815 = vunpack.c.l.b16 %v666
        %v816 = vunpack.c.l.b16 %v667
        %v817 = vunpack.c.l.b16 %v668
        %v818 = vunpack.c.l.b16 %v669
        %v819 = vunpack.c.l.b16 %v670
        %v820 = vunpack.c.l.b16 %v671
        %v821 = vunpack.c.l.b16 %v672
        %v822 = vunpack.c.l.b16 %v673
        %v823 = vunpack.c.l.b16 %v674
        %v824 = vunpack.c.l.b16 %v675
        %v825 = vunpack.c.l.b16 %v676
        %v826 = vunpack.c.l.b16 %v677
        %v827 = vunpack.c.l.b16 %v678
        %v828 = vunpack.c.l.b16 %v679
        %v829 = vunpack.c.l.b16 %v680
        %v830 = vunpack.c.l.b16 %v681
        %v831 = vunpack.c.l.b16 %v682
        %v832 = vunpack.c.l.b16 %v683
        %v833 = vunpack.c.l.b16 %v684
        %v834 = vunpack.c.l.b16 %v685
        %v835 = vunpack.c.l.b16 %v686
        %v836 = vunpack.c.l.b16 %v687
        %v837 = vunpack.c.l.b16 %v688
        %v838 = vunpack.c.l.b16 %v689
        %v839 = vunpack.c.l.b16 %v690
        %v840 = vunpack.c.l.b16 %v691
        %v841 = vunpack.c.l.b16 %v692
        %v842 = vunpack.c.l.b16 %v693
        %v843 = vunpack.c.l.b16 %v694
        %v844 = vunpack.c.l.b16 %v695
        %v845 = vunpack.c.l.b16 %v696
        %v846 = vunpack.c.l.b16 %v697
        %v847 = vunpack.c.l.b16 %v698
        %v848 = vunpack.c.l.b16 %v699
        %v849 = vunpack.c.l.b16 %v700
        %v850 = vunpack.c.l.b16 %v701
        %v851 = vunpack.c.l.b16 %v702
        %v852 = vunpack.c.l.b16 %v703
        %v853 = vunpack.c.l.b16 %v704
        %v854 = vunpack.c.l.b16 %v705
        %v855 = vunpack.c.l.b16 %v706
        %v856 = vunpack.c.l.b16 %v707
        %v857 = vpack.c.b16 %v810, %v809
        %v858 = vpack.c.b16 %v812, %v811
        %v859 = vpack.c.b16 %v814, %v813
        %v860 = vpack.c.b16 %v816, %v815
        %v861 = vpack.c.b16 %v818, %v817
        %v862 = vpack.c.b16 %v820, %v819
        %v863 = vpack.c.b16 %v822, %v821
        %v864 = vpack.c.b16 %v824, %v823
        %v865 = vpack.c.b16 %v826, %v825
        %v866 = vpack.c.b16 %v828, %v827
        %v867 = vpack.c.b16 %v830, %v829
        %v868 = vpack.c.b16 %v832, %v831
        %v869 = vpack.c.b16 %v834, %v833
        %v870 = vpack.c.b16 %v836, %v835
        %v871 = vpack.c.b16 %v838, %v837
        %v872 = vpack.c.b16 %v840, %v839
        %v873 = vpack.c.b16 %v842, %v841
        %v874 = vpack.c.b16 %v844, %v843
        %v875 = vpack.c.b16 %v846, %v845
        %v876 = vpack.c.b16 %v848, %v847
        %v877 = vpack.c.b16 %v850, %v849
        %v878 = vpack.c.b16 %v852, %v851
        %v879 = vpack.c.b16 %v854, %v853
        %v880 = vpack.c.b16 %v856, %v855
        %905 = vmatprep.subr.bf16.mxu0 0
        %906 = vmatpush1.bf16.msra.mxu0 %v864
        %907 = vmatprep.subr.bf16.mxu0 0
        %908 = vmatpush1.bf16.msra.mxu0 %v863
        %909 = vmatprep.subr.bf16.mxu0 0
        %910 = vmatpush1.bf16.msra.mxu0 %v862
        %911 = vmatprep.subr.bf16.mxu0 0
        %912 = vmatpush1.bf16.msra.mxu0 %v861
        %913 = vmatprep.subr.bf16.mxu0 0
        %914 = vmatpush1.bf16.msra.mxu0 %v860
        %915 = vmatprep.subr.bf16.mxu0 0
        %916 = vmatpush1.bf16.msra.mxu0 %v859
        %917 = vmatprep.subr.bf16.mxu0 0
        %918 = vmatpush1.bf16.msra.mxu0 %v858
        %919 = vmatprep.subr.bf16.mxu0 0
        %920 = vmatpush1.bf16.msra.mxu0 %v857
        %921 = vmatprep.subr.bf16.mxu0 0
        %922 = vmatpush2.bf16.msra.mxu0 %v872
        %923 = vmatprep.subr.bf16.mxu0 0
        %924 = vmatpush2.bf16.msra.mxu0 %v871
        %925 = vmatprep.subr.bf16.mxu0 0
        %926 = vmatpush2.bf16.msra.mxu0 %v870
        %927 = vmatprep.subr.bf16.mxu0 0
        %928 = vmatpush2.bf16.msra.mxu0 %v869
        %929 = vmatprep.subr.bf16.mxu0 0
        %930 = vmatpush2.bf16.msra.mxu0 %v868
        %931 = vmatprep.subr.bf16.mxu0 0
        %932 = vmatpush2.bf16.msra.mxu0 %v867
        %933 = vmatprep.subr.bf16.mxu0 0
        %934 = vmatpush2.bf16.msra.mxu0 %v866
        %935 = vmatprep.subr.bf16.mxu0 0
        %936 = vmatpush2.bf16.msra.mxu0 %v865
        %937 = vmatprep.mubr.bf16.mxu0 %v744
        %938 = vmatmul.mubr.bf16.gmra.mxu0 %v743
        %v939 = vpop.f32.mrf.mxu0
        %v940 = vadd.f32 %v712, %v939
        %v941 = vpop.f32.mrf.mxu0
        %v942 = vpop.f32.mrf.mxu0
        %v943 = vadd.f32 %v712, %v942
        %v944 = vpop.f32.mrf.mxu0
        %945 = vmatprep.mubr.bf16.mxu0 %v747
        %946 = vmatmul.mubr.bf16.gmra.mxu0 %v746
        %v947 = vpop.f32.mrf.mxu0
        %v948 = vadd.f32 %v712, %v947
        %v949 = vpop.f32.mrf.mxu0
        %v950 = vpop.f32.mrf.mxu0
        %v951 = vadd.f32 %v712, %v950
        %v952 = vpop.f32.mrf.mxu0
        %953 = vmatprep.mubr.bf16.mxu0 %v750
        %954 = vmatmul.mubr.bf16.gmra.mxu0 %v749
        %v955 = vpop.f32.mrf.mxu0
        %v956 = vadd.f32 %v712, %v955
        %v957 = vpop.f32.mrf.mxu0
        %v958 = vpop.f32.mrf.mxu0
        %v959 = vadd.f32 %v712, %v958
        %v960 = vpop.f32.mrf.mxu0
        %961 = vdwg.mxu0
        %962 = vmatprep.subr.bf16.mxu0 0
        %963 = vmatpush1.bf16.msra.mxu0 %v880
        %964 = vmatprep.subr.bf16.mxu0 0
        %965 = vmatpush1.bf16.msra.mxu0 %v879
        %966 = vmatprep.subr.bf16.mxu0 0
        %967 = vmatpush1.bf16.msra.mxu0 %v878
        %968 = vmatprep.subr.bf16.mxu0 0
        %969 = vmatpush1.bf16.msra.mxu0 %v877
        %970 = vmatprep.subr.bf16.mxu0 0
        %971 = vmatpush1.bf16.msra.mxu0 %v876
        %972 = vmatprep.subr.bf16.mxu0 0
        %973 = vmatpush1.bf16.msra.mxu0 %v875
        %974 = vmatprep.subr.bf16.mxu0 0
        %975 = vmatpush1.bf16.msra.mxu0 %v874
        %976 = vmatprep.subr.bf16.mxu0 0
        %977 = vmatpush1.bf16.msra.mxu0 %v873
        %978 = vmatprep.subr.bf16.mxu0 0
        %979 = vmatpush2.bf16.msra.mxu0 0
        %980 = vmatprep.subr.bf16.mxu0 0
        %981 = vmatpush2.bf16.msra.mxu0 0
        %982 = vmatprep.subr.bf16.mxu0 0
        %983 = vmatpush2.bf16.msra.mxu0 0
        %984 = vmatprep.subr.bf16.mxu0 0
        %985 = vmatpush2.bf16.msra.mxu0 0
        %986 = vmatprep.subr.bf16.mxu0 0
        %987 = vmatpush2.bf16.msra.mxu0 0
        %988 = vmatprep.subr.bf16.mxu0 0
        %989 = vmatpush2.bf16.msra.mxu0 0
        %990 = vmatprep.subr.bf16.mxu0 0
        %991 = vmatpush2.bf16.msra.mxu0 0
        %992 = vmatprep.subr.bf16.mxu0 0
        %993 = vmatpush2.bf16.msra.mxu0 0
        %994 = vmatprep.mubr.bf16.mxu0 0
        %995 = vmatmul.mubr.bf16.gmra.mxu0 %v745
        %v996 = vpop.f32.mrf.mxu0
        %v997 = vadd.f32 %v940, %v996
        %v998 = vpop.f32.mrf.mxu0
        %v999 = vpop.f32.mrf.mxu0
        %v1000 = vadd.f32 %v943, %v999
        %v1001 = vpop.f32.mrf.mxu0
        %1002 = vmatprep.mubr.bf16.mxu0 0
        %1003 = vmatmul.mubr.bf16.gmra.mxu0 %v748
        %v1004 = vpop.f32.mrf.mxu0
        %v1005 = vadd.f32 %v948, %v1004
        %v1006 = vpop.f32.mrf.mxu0
        %v1007 = vpop.f32.mrf.mxu0
        %v1008 = vadd.f32 %v951, %v1007
        %v1009 = vpop.f32.mrf.mxu0
        %1010 = vmatprep.mubr.bf16.mxu0 0
        %1011 = vmatmul.mubr.bf16.gmra.mxu0 %v751
        %v1012 = vpop.f32.mrf.mxu0
        %v1013 = vadd.f32 %v956, %v1012
        %v1014 = vpop.f32.mrf.mxu0
        %v1015 = vpop.f32.mrf.mxu0
        %v1016 = vadd.f32 %v959, %v1015
        %v1017 = vpop.f32.mrf.mxu0
        %1018 = vdwg.mxu0
        %v1019 = vsel %vm425, 1, 0
        %v1020 = vsel %vm426, 1, 0
        %v1021 = vsel %vm427, 1, 0
        %v1022 = vsel %vm428, 1, 0
        %v1023 = vsel %vm429, 1, 0
        %v1024 = vsel %vm430, 1, 0
        %vm1025 = vcmp.eq.s32.totalorder %v1019, 1
        %vm1026 = vcmp.eq.s32.totalorder %v1020, 1
        %vm1027 = vcmp.eq.s32.totalorder %v1021, 1
        %vm1028 = vcmp.eq.s32.totalorder %v1022, 1
        %vm1029 = vcmp.eq.s32.totalorder %v1023, 1
        %vm1030 = vcmp.eq.s32.totalorder %v1024, 1
        %v1031 = vsel %vm1025, %v997, 0.0
        %v1032 = vsel %vm1026, %v1000, 0.0
        %v1033 = vsel %vm1027, %v1005, 0.0
        %v1034 = vsel %vm1028, %v1008, 0.0
        %v1035 = vsel %vm1029, %v1013, 0.0
        %v1036 = vsel %vm1030, %v1016, 0.0
        %vm1037 = vcmp.gt.f32.partialorder %v1031, 0.0
        %vm1038 = vcmp.gt.f32.partialorder %v1032, 0.0
        %vm1039 = vcmp.gt.f32.partialorder %v1033, 0.0
        %vm1040 = vcmp.gt.f32.partialorder %v1034, 0.0
        %vm1041 = vcmp.gt.f32.partialorder %v1035, 0.0
        %vm1042 = vcmp.gt.f32.partialorder %v1036, 0.0
        %v1043 = vmul.f32 %v1031, 0.01
        %v1044 = vmul.f32 %v1032, 0.01
        %v1045 = vmul.f32 %v1033, 0.01
        %v1046 = vmul.f32 %v1034, 0.01
        %v1047 = vmul.f32 %v1035, 0.01
        %v1048 = vmul.f32 %v1036, 0.01
        %v1049 = vsel %vm1037, %v1031, %v1043
        %v1050 = vsel %vm1038, %v1032, %v1044
        %v1051 = vsel %vm1039, %v1033, %v1045
        %v1052 = vsel %vm1040, %v1034, %v1046
        %v1053 = vsel %vm1041, %v1035, %v1047
        %v1054 = vsel %vm1042, %v1036, %v1048
        %v1055 = vpack.c.bf16 %v1050, %v1049
        %v1056 = vpack.c.bf16 %v1052, %v1051
        %v1057 = vpack.c.bf16 %v1054, %v1053
        %v1061 = vunpack.c.l.b16 %v1055
        %v1062 = vunpack.c.h.b16 %v1055
        %v1063 = vunpack.c.l.b16 %v1056
        %v1064 = vunpack.c.h.b16 %v1056
        %v1065 = vunpack.c.l.b16 %v1057
        %v1066 = vunpack.c.h.b16 %v1057
        %v1067 = vpack.c.b16 %v1061, %v1061
        %v1068 = vpack.c.b16 %v1062, %v1062
        %v1069 = vpack.c.b16 %v1063, %v1063
        %v1070 = vpack.c.b16 %v1064, %v1064
        %v1071 = vpack.c.b16 %v1065, %v1065
        %v1072 = vpack.c.b16 %v1066, %v1066
        %vm1073 = vcmask 1044484
        %vm1074 = vmor %vm577, %vm1073
        %v1075 = vrot.slane %v1067, 7
        %v1076 = vrot.slane %v1075, 4
        %v1077 = vrot.slane %v1068, 7
        %v1078 = vsel %vm1074, %v1076, %v1077
        %v1079 = vrot.slane %v1077, 4
        %v1080 = vrot.slane %v1069, 7
        %v1081 = vsel %vm1074, %v1079, %v1080
        %v1082 = vrot.slane %v1080, 4
        %v1083 = vrot.slane %v1070, 7
        %v1084 = vsel %vm1074, %v1082, %v1083
        %v1085 = vrot.slane %v1083, 4
        %v1086 = vrot.slane %v1071, 7
        %v1087 = vsel %vm1074, %v1085, %v1086
        %v1088 = vrot.slane %v1086, 4
        %v1089 = vrot.slane %v1072, 7
        %v1090 = vsel %vm1074, %v1088, %v1089
        %v1091 = vrot.slane %v1089, 4
        %1099 = vst [vmem:[#allocation2 + $0xc] sm:$0xe] %v1075
        %1100 = vst [vmem:[#allocation2 + $0x18] sm:$0xf] %v1078
        %1101 = vst [vmem:[#allocation2 + $0x24] sm:$0xf] %v1081
        %1102 = vst [vmem:[#allocation2 + $0x30] sm:$0xf] %v1084
        %1103 = vst [vmem:[#allocation2 + $0x3c] sm:$0xf] %v1087
        %1104 = vst [vmem:[#allocation2 + $0x48] sm:$0xf] %v1090
        %1105 = vst [vmem:[#allocation2 + $0x54] sm:$0x1] %v1091
        %1112 = vst [vmem:[#allocation2 + $0x10] sm:$0xf] %v1067
        %1113 = vst [vmem:[#allocation2 + $0x1c] sm:$0xf] %v1068
        %1114 = vst [vmem:[#allocation2 + $0x28] sm:$0xf] %v1069
        %1115 = vst [vmem:[#allocation2 + $0x34] sm:$0xf] %v1070
        %1116 = vst [vmem:[#allocation2 + $0x40] sm:$0xf] %v1071
        %1117 = vst [vmem:[#allocation2 + $0x4c] sm:$0xf] %v1072
        %vm1118 = vcmask 1042432
        %vm1119 = vcmask 1046532
        %vm1120 = vmor %vm1118, %vm1119
        %v1121 = vrot.slane %v1067, 5
        %v1122 = vrot.slane %v1121, 4
        %v1123 = vrot.slane %v1068, 5
        %v1124 = vsel %vm1120, %v1122, %v1123
        %v1125 = vrot.slane %v1123, 4
        %v1126 = vrot.slane %v1069, 5
        %v1127 = vsel %vm1120, %v1125, %v1126
        %v1128 = vrot.slane %v1126, 4
        %v1129 = vrot.slane %v1070, 5
        %v1130 = vsel %vm1120, %v1128, %v1129
        %v1131 = vrot.slane %v1129, 4
        %v1132 = vrot.slane %v1071, 5
        %v1133 = vsel %vm1120, %v1131, %v1132
        %v1134 = vrot.slane %v1132, 4
        %v1135 = vrot.slane %v1072, 5
        %v1136 = vsel %vm1120, %v1134, %v1135
        %v1137 = vrot.slane %v1135, 4
        %1145 = vst [vmem:[#allocation2 + $0x8] sm:$0x8] %v1121
        %1146 = vst [vmem:[#allocation2 + $0x14] sm:$0xf] %v1124
        %1147 = vst [vmem:[#allocation2 + $0x20] sm:$0xf] %v1127
        %1148 = vst [vmem:[#allocation2 + $0x2c] sm:$0xf] %v1130
        %1149 = vst [vmem:[#allocation2 + $0x38] sm:$0xf] %v1133
        %1150 = vst [vmem:[#allocation2 + $0x44] sm:$0xf] %v1136
        %1151 = vst [vmem:[#allocation2 + $0x50] sm:$0x7] %v1137
        %v1152 = vld [vmem:[#allocation2 + $0xc] sm:$0xff]
        %v1153 = vld [vmem:[#allocation2 + $0x14] sm:$0xf]
        %v1154 = vld [vmem:[#allocation2 + $0x18] sm:$0xff]
        %v1155 = vld [vmem:[#allocation2 + $0x20] sm:$0xf]
        %v1156 = vld [vmem:[#allocation2 + $0x24] sm:$0xff]
        %v1157 = vld [vmem:[#allocation2 + $0x2c] sm:$0xf]
        %v1158 = vld [vmem:[#allocation2 + $0x30] sm:$0xff]
        %v1159 = vld [vmem:[#allocation2 + $0x38] sm:$0xf]
        %v1160 = vld [vmem:[#allocation2 + $0x3c] sm:$0xff]
        %v1161 = vld [vmem:[#allocation2 + $0x44] sm:$0xf]
        %v1162 = vld [vmem:[#allocation2 + $0x48] sm:$0xff]
        %v1163 = vld [vmem:[#allocation2 + $0x50] sm:$0xf]
        %v1164 = vld [vmem:[#allocation9 + $0xc0] sm:$0xf]
        %v1165 = vld [vmem:[#allocation9 + $0xc4] sm:$0xf]
        %v1166 = vld [vmem:[#allocation9 + $0xc8] sm:$0xf]
        %v1167 = vld [vmem:[#allocation9 + $0xcc] sm:$0xf]
        %v1168 = vld [vmem:[#allocation9 + $0xd0] sm:$0xf]
        %v1169 = vld [vmem:[#allocation9 + $0xd4] sm:$0xf]
        %v1170 = vld [vmem:[#allocation9 + $0xd8] sm:$0xf]
        %v1171 = vld [vmem:[#allocation9 + $0xdc] sm:$0xf]
        %v1172 = vld [vmem:[#allocation9 + $0xe0] sm:$0xf]
        %v1173 = vld [vmem:[#allocation9 + $0xe4] sm:$0xf]
        %v1174 = vld [vmem:[#allocation9 + $0xe8] sm:$0xf]
        %v1175 = vld [vmem:[#allocation9 + $0xec] sm:$0xf]
        %v1176 = vld [vmem:[#allocation9 + $0xf0] sm:$0xf]
        %v1177 = vld [vmem:[#allocation9 + $0xf4] sm:$0xf]
        %v1178 = vld [vmem:[#allocation9 + $0xf8] sm:$0xf]
        %v1179 = vld [vmem:[#allocation9 + $0xfc] sm:$0xf]
        %v1180 = vld [vmem:[#allocation9 + $0x100] sm:$0xf]
        %v1181 = vld [vmem:[#allocation9 + $0x104] sm:$0xf]
        %v1182 = vld [vmem:[#allocation9 + $0x108] sm:$0xf]
        %v1183 = vld [vmem:[#allocation9 + $0x10c] sm:$0xf]
        %v1184 = vld [vmem:[#allocation9 + $0x110] sm:$0xf]
        %v1185 = vld [vmem:[#allocation9 + $0x114] sm:$0xf]
        %v1186 = vld [vmem:[#allocation9 + $0x118] sm:$0xf]
        %v1187 = vld [vmem:[#allocation9 + $0x11c] sm:$0xf]
        %v1188 = vld [vmem:[#allocation9 + $0x120] sm:$0xf]
        %v1189 = vld [vmem:[#allocation9 + $0x124] sm:$0xf]
        %v1190 = vld [vmem:[#allocation9 + $0x128] sm:$0xf]
        %v1191 = vld [vmem:[#allocation9 + $0x12c] sm:$0xf]
        %v1192 = vld [vmem:[#allocation9 + $0x130] sm:$0xf]
        %v1193 = vld [vmem:[#allocation9 + $0x134] sm:$0xf]
        %v1194 = vld [vmem:[#allocation9 + $0x138] sm:$0xf]
        %v1195 = vld [vmem:[#allocation9 + $0x13c] sm:$0xf]
        %v1196 = vld [vmem:[#allocation9 + $0x140] sm:$0xf]
        %v1197 = vld [vmem:[#allocation9 + $0x144] sm:$0xf]
        %v1198 = vld [vmem:[#allocation9 + $0x148] sm:$0xf]
        %v1199 = vld [vmem:[#allocation9 + $0x14c] sm:$0xf]
        %v1200 = vld [vmem:[#allocation9 + $0x150] sm:$0xf]
        %v1201 = vld [vmem:[#allocation9 + $0x154] sm:$0xf]
        %v1202 = vld [vmem:[#allocation9 + $0x158] sm:$0xf]
        %v1203 = vld [vmem:[#allocation9 + $0x15c] sm:$0xf]
        %v1204 = vld [vmem:[#allocation9 + $0x160] sm:$0xf]
        %v1205 = vld [vmem:[#allocation9 + $0x164] sm:$0xf]
        %v1206 = vld [vmem:[#allocation9 + $0x168] sm:$0xf]
        %v1207 = vld [vmem:[#allocation9 + $0x16c] sm:$0xf]
        %v1208 = vld [vmem:[#allocation9 + $0x170] sm:$0xf]
        %v1209 = vld [vmem:[#allocation9 + $0x174] sm:$0xf]
        %v1210 = vld [vmem:[#allocation9 + $0x178] sm:$0xf]
        %v1211 = vld [vmem:[#allocation9 + $0x17c] sm:$0xf]
        %v1212 = vld [vmem:[%s4 + $0x1] sm:$0x1]
        %v1213 = vlaneseq
        %v1214 = vshrl.u32 %v1213, 7
        %v1215 = vsub.s32 0, %v1214
        %v1216 = vrot.slane %v1212, %v1215
        %v1229 = vunpack.c.l.b16 %v1152
        %v1230 = vunpack.c.h.b16 %v1152
        %v1231 = vunpack.c.l.b16 %v1153
        %v1232 = vunpack.c.l.b16 %v1154
        %v1233 = vunpack.c.h.b16 %v1154
        %v1234 = vunpack.c.l.b16 %v1155
        %v1235 = vunpack.c.l.b16 %v1156
        %v1236 = vunpack.c.h.b16 %v1156
        %v1237 = vunpack.c.l.b16 %v1157
        %v1238 = vunpack.c.l.b16 %v1158
        %v1239 = vunpack.c.h.b16 %v1158
        %v1240 = vunpack.c.l.b16 %v1159
        %v1241 = vunpack.c.l.b16 %v1160
        %v1242 = vunpack.c.h.b16 %v1160
        %v1243 = vunpack.c.l.b16 %v1161
        %v1244 = vunpack.c.l.b16 %v1162
        %v1245 = vunpack.c.h.b16 %v1162
        %v1246 = vunpack.c.l.b16 %v1163
        %v1247 = vpack.c.b16 %v1232, %v1229
        %v1248 = vpack.c.b16 %v1233, %v1230
        %v1249 = vpack.c.b16 %v1234, %v1231
        %v1250 = vpack.c.b16 %v1238, %v1235
        %v1251 = vpack.c.b16 %v1239, %v1236
        %v1252 = vpack.c.b16 %v1240, %v1237
        %v1253 = vpack.c.b16 %v1244, %v1241
        %v1254 = vpack.c.b16 %v1245, %v1242
        %v1255 = vpack.c.b16 %v1246, %v1243
        %v1313 = vunpack.c.l.b16 %v1164
        %v1314 = vunpack.c.l.b16 %v1165
        %v1315 = vunpack.c.l.b16 %v1166
        %v1316 = vunpack.c.l.b16 %v1167
        %v1317 = vunpack.c.l.b16 %v1168
        %v1318 = vunpack.c.l.b16 %v1169
        %v1319 = vunpack.c.l.b16 %v1170
        %v1320 = vunpack.c.l.b16 %v1171
        %v1321 = vunpack.c.l.b16 %v1172
        %v1322 = vunpack.c.l.b16 %v1173
        %v1323 = vunpack.c.l.b16 %v1174
        %v1324 = vunpack.c.l.b16 %v1175
        %v1325 = vunpack.c.l.b16 %v1176
        %v1326 = vunpack.c.l.b16 %v1177
        %v1327 = vunpack.c.l.b16 %v1178
        %v1328 = vunpack.c.l.b16 %v1179
        %v1329 = vunpack.c.l.b16 %v1180
        %v1330 = vunpack.c.l.b16 %v1181
        %v1331 = vunpack.c.l.b16 %v1182
        %v1332 = vunpack.c.l.b16 %v1183
        %v1333 = vunpack.c.l.b16 %v1184
        %v1334 = vunpack.c.l.b16 %v1185
        %v1335 = vunpack.c.l.b16 %v1186
        %v1336 = vunpack.c.l.b16 %v1187
        %v1337 = vunpack.c.l.b16 %v1188
        %v1338 = vunpack.c.l.b16 %v1189
        %v1339 = vunpack.c.l.b16 %v1190
        %v1340 = vunpack.c.l.b16 %v1191
        %v1341 = vunpack.c.l.b16 %v1192
        %v1342 = vunpack.c.l.b16 %v1193
        %v1343 = vunpack.c.l.b16 %v1194
        %v1344 = vunpack.c.l.b16 %v1195
        %v1345 = vunpack.c.l.b16 %v1196
        %v1346 = vunpack.c.l.b16 %v1197
        %v1347 = vunpack.c.l.b16 %v1198
        %v1348 = vunpack.c.l.b16 %v1199
        %v1349 = vunpack.c.l.b16 %v1200
        %v1350 = vunpack.c.l.b16 %v1201
        %v1351 = vunpack.c.l.b16 %v1202
        %v1352 = vunpack.c.l.b16 %v1203
        %v1353 = vunpack.c.l.b16 %v1204
        %v1354 = vunpack.c.l.b16 %v1205
        %v1355 = vunpack.c.l.b16 %v1206
        %v1356 = vunpack.c.l.b16 %v1207
        %v1357 = vunpack.c.l.b16 %v1208
        %v1358 = vunpack.c.l.b16 %v1209
        %v1359 = vunpack.c.l.b16 %v1210
        %v1360 = vunpack.c.l.b16 %v1211
        %v1361 = vpack.c.b16 %v1314, %v1313
        %v1362 = vpack.c.b16 %v1316, %v1315
        %v1363 = vpack.c.b16 %v1318, %v1317
        %v1364 = vpack.c.b16 %v1320, %v1319
        %v1365 = vpack.c.b16 %v1322, %v1321
        %v1366 = vpack.c.b16 %v1324, %v1323
        %v1367 = vpack.c.b16 %v1326, %v1325
        %v1368 = vpack.c.b16 %v1328, %v1327
        %v1369 = vpack.c.b16 %v1330, %v1329
        %v1370 = vpack.c.b16 %v1332, %v1331
        %v1371 = vpack.c.b16 %v1334, %v1333
        %v1372 = vpack.c.b16 %v1336, %v1335
        %v1373 = vpack.c.b16 %v1338, %v1337
        %v1374 = vpack.c.b16 %v1340, %v1339
        %v1375 = vpack.c.b16 %v1342, %v1341
        %v1376 = vpack.c.b16 %v1344, %v1343
        %v1377 = vpack.c.b16 %v1346, %v1345
        %v1378 = vpack.c.b16 %v1348, %v1347
        %v1379 = vpack.c.b16 %v1350, %v1349
        %v1380 = vpack.c.b16 %v1352, %v1351
        %v1381 = vpack.c.b16 %v1354, %v1353
        %v1382 = vpack.c.b16 %v1356, %v1355
        %v1383 = vpack.c.b16 %v1358, %v1357
        %v1384 = vpack.c.b16 %v1360, %v1359
        %1409 = vmatprep.subr.bf16.mxu0 0
        %1410 = vmatpush1.bf16.msra.mxu0 %v1368
        %1411 = vmatprep.subr.bf16.mxu0 0
        %1412 = vmatpush1.bf16.msra.mxu0 %v1367
        %1413 = vmatprep.subr.bf16.mxu0 0
        %1414 = vmatpush1.bf16.msra.mxu0 %v1366
        %1415 = vmatprep.subr.bf16.mxu0 0
        %1416 = vmatpush1.bf16.msra.mxu0 %v1365
        %1417 = vmatprep.subr.bf16.mxu0 0
        %1418 = vmatpush1.bf16.msra.mxu0 %v1364
        %1419 = vmatprep.subr.bf16.mxu0 0
        %1420 = vmatpush1.bf16.msra.mxu0 %v1363
        %1421 = vmatprep.subr.bf16.mxu0 0
        %1422 = vmatpush1.bf16.msra.mxu0 %v1362
        %1423 = vmatprep.subr.bf16.mxu0 0
        %1424 = vmatpush1.bf16.msra.mxu0 %v1361
        %1425 = vmatprep.subr.bf16.mxu0 0
        %1426 = vmatpush2.bf16.msra.mxu0 %v1376
        %1427 = vmatprep.subr.bf16.mxu0 0
        %1428 = vmatpush2.bf16.msra.mxu0 %v1375
        %1429 = vmatprep.subr.bf16.mxu0 0
        %1430 = vmatpush2.bf16.msra.mxu0 %v1374
        %1431 = vmatprep.subr.bf16.mxu0 0
        %1432 = vmatpush2.bf16.msra.mxu0 %v1373
        %1433 = vmatprep.subr.bf16.mxu0 0
        %1434 = vmatpush2.bf16.msra.mxu0 %v1372
        %1435 = vmatprep.subr.bf16.mxu0 0
        %1436 = vmatpush2.bf16.msra.mxu0 %v1371
        %1437 = vmatprep.subr.bf16.mxu0 0
        %1438 = vmatpush2.bf16.msra.mxu0 %v1370
        %1439 = vmatprep.subr.bf16.mxu0 0
        %1440 = vmatpush2.bf16.msra.mxu0 %v1369
        %1441 = vmatprep.mubr.bf16.mxu0 %v1248
        %1442 = vmatmul.mubr.bf16.gmra.mxu0 %v1247
        %v1443 = vpop.f32.mrf.mxu0
        %v1444 = vadd.f32 %v1216, %v1443
        %v1445 = vpop.f32.mrf.mxu0
        %v1446 = vpop.f32.mrf.mxu0
        %v1447 = vadd.f32 %v1216, %v1446
        %v1448 = vpop.f32.mrf.mxu0
        %1449 = vmatprep.mubr.bf16.mxu0 %v1251
        %1450 = vmatmul.mubr.bf16.gmra.mxu0 %v1250
        %v1451 = vpop.f32.mrf.mxu0
        %v1452 = vadd.f32 %v1216, %v1451
        %v1453 = vpop.f32.mrf.mxu0
        %v1454 = vpop.f32.mrf.mxu0
        %v1455 = vadd.f32 %v1216, %v1454
        %v1456 = vpop.f32.mrf.mxu0
        %1457 = vmatprep.mubr.bf16.mxu0 %v1254
        %1458 = vmatmul.mubr.bf16.gmra.mxu0 %v1253
        %v1459 = vpop.f32.mrf.mxu0
        %v1460 = vadd.f32 %v1216, %v1459
        %v1461 = vpop.f32.mrf.mxu0
        %v1462 = vpop.f32.mrf.mxu0
        %v1463 = vadd.f32 %v1216, %v1462
        %v1464 = vpop.f32.mrf.mxu0
        %1465 = vdwg.mxu0
        %1466 = vmatprep.subr.bf16.mxu0 0
        %1467 = vmatpush1.bf16.msra.mxu0 %v1384
        %1468 = vmatprep.subr.bf16.mxu0 0
        %1469 = vmatpush1.bf16.msra.mxu0 %v1383
        %1470 = vmatprep.subr.bf16.mxu0 0
        %1471 = vmatpush1.bf16.msra.mxu0 %v1382
        %1472 = vmatprep.subr.bf16.mxu0 0
        %1473 = vmatpush1.bf16.msra.mxu0 %v1381
        %1474 = vmatprep.subr.bf16.mxu0 0
        %1475 = vmatpush1.bf16.msra.mxu0 %v1380
        %1476 = vmatprep.subr.bf16.mxu0 0
        %1477 = vmatpush1.bf16.msra.mxu0 %v1379
        %1478 = vmatprep.subr.bf16.mxu0 0
        %1479 = vmatpush1.bf16.msra.mxu0 %v1378
        %1480 = vmatprep.subr.bf16.mxu0 0
        %1481 = vmatpush1.bf16.msra.mxu0 %v1377
        %1482 = vmatprep.subr.bf16.mxu0 0
        %1483 = vmatpush2.bf16.msra.mxu0 0
        %1484 = vmatprep.subr.bf16.mxu0 0
        %1485 = vmatpush2.bf16.msra.mxu0 0
        %1486 = vmatprep.subr.bf16.mxu0 0
        %1487 = vmatpush2.bf16.msra.mxu0 0
        %1488 = vmatprep.subr.bf16.mxu0 0
        %1489 = vmatpush2.bf16.msra.mxu0 0
        %1490 = vmatprep.subr.bf16.mxu0 0
        %1491 = vmatpush2.bf16.msra.mxu0 0
        %1492 = vmatprep.subr.bf16.mxu0 0
        %1493 = vmatpush2.bf16.msra.mxu0 0
        %1494 = vmatprep.subr.bf16.mxu0 0
        %1495 = vmatpush2.bf16.msra.mxu0 0
        %1496 = vmatprep.subr.bf16.mxu0 0
        %1497 = vmatpush2.bf16.msra.mxu0 0
        %1498 = vmatprep.mubr.bf16.mxu0 0
        %1499 = vmatmul.mubr.bf16.gmra.mxu0 %v1249
        %v1500 = vpop.f32.mrf.mxu0
        %v1501 = vadd.f32 %v1444, %v1500
        %v1502 = vpop.f32.mrf.mxu0
        %v1503 = vpop.f32.mrf.mxu0
        %v1504 = vadd.f32 %v1447, %v1503
        %v1505 = vpop.f32.mrf.mxu0
        %1506 = vmatprep.mubr.bf16.mxu0 0
        %1507 = vmatmul.mubr.bf16.gmra.mxu0 %v1252
        %v1508 = vpop.f32.mrf.mxu0
        %v1509 = vadd.f32 %v1452, %v1508
        %v1510 = vpop.f32.mrf.mxu0
        %v1511 = vpop.f32.mrf.mxu0
        %v1512 = vadd.f32 %v1455, %v1511
        %v1513 = vpop.f32.mrf.mxu0
        %1514 = vmatprep.mubr.bf16.mxu0 0
        %1515 = vmatmul.mubr.bf16.gmra.mxu0 %v1255
        %v1516 = vpop.f32.mrf.mxu0
        %v1517 = vadd.f32 %v1460, %v1516
        %v1518 = vpop.f32.mrf.mxu0
        %v1519 = vpop.f32.mrf.mxu0
        %v1520 = vadd.f32 %v1463, %v1519
        %v1521 = vpop.f32.mrf.mxu0
        %1522 = vdwg.mxu0
        %v1523 = vsel %vm1025, %v1501, 0.0
        %v1524 = vsel %vm1026, %v1504, 0.0
        %v1525 = vsel %vm1027, %v1509, 0.0
        %v1526 = vsel %vm1028, %v1512, 0.0
        %v1527 = vsel %vm1029, %v1517, 0.0
        %v1528 = vsel %vm1030, %v1520, 0.0
        %v1529 = vadd.f32 %v461, %v1523
        %v1530 = vadd.f32 %v462, %v1524
        %v1531 = vadd.f32 %v463, %v1525
        %v1532 = vadd.f32 %v464, %v1526
        %v1533 = vadd.f32 %v465, %v1527
        %v1534 = vadd.f32 %v466, %v1528
        %vm1535 = vcmp.gt.f32.partialorder %v1529, 0.0
        %vm1536 = vcmp.gt.f32.partialorder %v1530, 0.0
        %vm1537 = vcmp.gt.f32.partialorder %v1531, 0.0
        %vm1538 = vcmp.gt.f32.partialorder %v1532, 0.0
        %vm1539 = vcmp.gt.f32.partialorder %v1533, 0.0
        %vm1540 = vcmp.gt.f32.partialorder %v1534, 0.0
        %v1541 = vmul.f32 %v1529, 0.01
        %v1542 = vmul.f32 %v1530, 0.01
        %v1543 = vmul.f32 %v1531, 0.01
        %v1544 = vmul.f32 %v1532, 0.01
        %v1545 = vmul.f32 %v1533, 0.01
        %v1546 = vmul.f32 %v1534, 0.01
        %v1547 = vsel %vm1535, %v1529, %v1541
        %v1548 = vsel %vm1536, %v1530, %v1542
        %v1549 = vsel %vm1537, %v1531, %v1543
        %v1550 = vsel %vm1538, %v1532, %v1544
        %v1551 = vsel %vm1539, %v1533, %v1545
        %v1552 = vsel %vm1540, %v1534, %v1546
        %v1553 = vpack.c.bf16 %v1548, %v1547
        %v1554 = vpack.c.bf16 %v1550, %v1549
        %v1555 = vpack.c.bf16 %v1552, %v1551
        %v1559 = vunpack.c.l.b16 %v1553
        %v1560 = vunpack.c.h.b16 %v1553
        %v1561 = vunpack.c.l.b16 %v1554
        %v1562 = vunpack.c.h.b16 %v1554
        %v1563 = vunpack.c.l.b16 %v1555
        %v1564 = vunpack.c.h.b16 %v1555
        %v1565 = vpack.c.b16 %v1559, %v1559
        %v1566 = vpack.c.b16 %v1560, %v1560
        %v1567 = vpack.c.b16 %v1561, %v1561
        %v1568 = vpack.c.b16 %v1562, %v1562
        %v1569 = vpack.c.b16 %v1563, %v1563
        %v1570 = vpack.c.b16 %v1564, %v1564
        %vm1571 = vsmask.f32 1280
        %vm1572 = vsmask.f32 5392
        %vm1573 = vmor %vm1571, %vm1572
        %v1575 = vshrl.u32 %v1565, 16
        %v1577 = vrot.slane %v1575, 6
        %v1578 = vshll.u32 %v1565, 16
        %v1580 = vrot.slane %v1578, 7
        %v1581 = vor.u32 %v1577, %v1580
        %v1582 = vrot.slane %v1581, 4
        %v1584 = vshrl.u32 %v1566, 16
        %v1586 = vrot.slane %v1584, 6
        %v1587 = vshll.u32 %v1566, 16
        %v1589 = vrot.slane %v1587, 7
        %v1590 = vor.u32 %v1586, %v1589
        %v1591 = vsel %vm1573, %v1582, %v1590
        %v1592 = vrot.slane %v1590, 4
        %v1594 = vshrl.u32 %v1567, 16
        %v1596 = vrot.slane %v1594, 6
        %v1597 = vshll.u32 %v1567, 16
        %v1599 = vrot.slane %v1597, 7
        %v1600 = vor.u32 %v1596, %v1599
        %v1601 = vsel %vm1573, %v1592, %v1600
        %v1602 = vrot.slane %v1600, 4
        %v1604 = vshrl.u32 %v1568, 16
        %v1606 = vrot.slane %v1604, 6
        %v1607 = vshll.u32 %v1568, 16
        %v1609 = vrot.slane %v1607, 7
        %v1610 = vor.u32 %v1606, %v1609
        %v1611 = vsel %vm1573, %v1602, %v1610
        %v1612 = vrot.slane %v1610, 4
        %v1614 = vshrl.u32 %v1569, 16
        %v1616 = vrot.slane %v1614, 6
        %v1617 = vshll.u32 %v1569, 16
        %v1619 = vrot.slane %v1617, 7
        %v1620 = vor.u32 %v1616, %v1619
        %v1621 = vsel %vm1573, %v1612, %v1620
        %v1622 = vrot.slane %v1620, 4
        %v1624 = vshrl.u32 %v1570, 16
        %v1626 = vrot.slane %v1624, 6
        %v1627 = vshll.u32 %v1570, 16
        %v1629 = vrot.slane %v1627, 7
        %v1630 = vor.u32 %v1626, %v1629
        %v1631 = vsel %vm1573, %v1622, %v1630
        %v1632 = vrot.slane %v1630, 4
        %vm1640 = vcmask 1043457
        %vm1641 = vsmask.f32 7942
        %vm1642 = vmand %vm1640, %vm1641
        %v1643 = vld [vmem:[#allocation2 + $0xc] sm:$0xe]
        %v1644 = vsel %vm1642, %v1581, %v1643
        %1645 = vst [vmem:[#allocation2 + $0xc] sm:$0xe] %v1644
        %1646 = vst [vmem:[#allocation2 + $0x18] sm:$0xf] %v1591
        %1647 = vst [vmem:[#allocation2 + $0x24] sm:$0xf] %v1601
        %1648 = vst [vmem:[#allocation2 + $0x30] sm:$0xf] %v1611
        %1649 = vst [vmem:[#allocation2 + $0x3c] sm:$0xf] %v1621
        %1650 = vst [vmem:[#allocation2 + $0x48] sm:$0xf] %v1631
        %vm1651 = vcmask 1041408
        %vm1652 = vmand %vm1651, %vm1571
        %v1653 = vld [vmem:[#allocation2 + $0x54] sm:$0x3]
        %v1654 = vsel %vm1652, %v1632, %v1653
        %1655 = vst [vmem:[#allocation2 + $0x54] sm:$0x3] %v1654
        %1662 = vst [vmem:[#allocation2 + $0x10] sm:$0xf] %v1565
        %1663 = vst [vmem:[#allocation2 + $0x1c] sm:$0xf] %v1566
        %1664 = vst [vmem:[#allocation2 + $0x28] sm:$0xf] %v1567
        %1665 = vst [vmem:[#allocation2 + $0x34] sm:$0xf] %v1568
        %1666 = vst [vmem:[#allocation2 + $0x40] sm:$0xf] %v1569
        %1667 = vst [vmem:[#allocation2 + $0x4c] sm:$0xf] %v1570
        %vm1668 = vsmask.f32 2304
        %vm1669 = vsmask.f32 6416
        %vm1670 = vmor %vm1668, %vm1669
        %v1671 = vrot.slane %v1575, 5
        %v1672 = vrot.slane %v1578, 6
        %v1673 = vor.u32 %v1671, %v1672
        %v1674 = vrot.slane %v1673, 4
        %v1675 = vrot.slane %v1584, 5
        %v1676 = vrot.slane %v1587, 6
        %v1677 = vor.u32 %v1675, %v1676
        %v1678 = vsel %vm1670, %v1674, %v1677
        %v1679 = vrot.slane %v1677, 4
        %v1680 = vrot.slane %v1594, 5
        %v1681 = vrot.slane %v1597, 6
        %v1682 = vor.u32 %v1680, %v1681
        %v1683 = vsel %vm1670, %v1679, %v1682
        %v1684 = vrot.slane %v1682, 4
        %v1685 = vrot.slane %v1604, 5
        %v1686 = vrot.slane %v1607, 6
        %v1687 = vor.u32 %v1685, %v1686
        %v1688 = vsel %vm1670, %v1684, %v1687
        %v1689 = vrot.slane %v1687, 4
        %v1690 = vrot.slane %v1614, 5
        %v1691 = vrot.slane %v1617, 6
        %v1692 = vor.u32 %v1690, %v1691
        %v1693 = vsel %vm1670, %v1689, %v1692
        %v1694 = vrot.slane %v1692, 4
        %v1695 = vrot.slane %v1624, 5
        %v1696 = vrot.slane %v1627, 6
        %v1697 = vor.u32 %v1695, %v1696
        %v1698 = vsel %vm1670, %v1694, %v1697
        %v1699 = vrot.slane %v1697, 4
        %vm1707 = vcmask 1043458
        %vm1708 = vsmask.f32 7946
        %vm1709 = vmand %vm1707, %vm1708
        %v1710 = vld [vmem:[#allocation2 + $0x8] sm:$0xc]
        %v1711 = vsel %vm1709, %v1673, %v1710
        %1712 = vst [vmem:[#allocation2 + $0x8] sm:$0xc] %v1711
        %1713 = vst [vmem:[#allocation2 + $0x14] sm:$0xf] %v1678
        %1714 = vst [vmem:[#allocation2 + $0x20] sm:$0xf] %v1683
        %1715 = vst [vmem:[#allocation2 + $0x2c] sm:$0xf] %v1688
        %1716 = vst [vmem:[#allocation2 + $0x38] sm:$0xf] %v1693
        %1717 = vst [vmem:[#allocation2 + $0x44] sm:$0xf] %v1698
        %vm1718 = vmand %vm1118, %vm1668
        %v1719 = vld [vmem:[#allocation2 + $0x50] sm:$0x7]
        %v1720 = vsel %vm1718, %v1699, %v1719
        %1721 = vst [vmem:[#allocation2 + $0x50] sm:$0x7] %v1720
        %v1722 = vld [vmem:[#allocation2 + $0xc] sm:$0xff]
        %v1723 = vld [vmem:[#allocation2 + $0x14] sm:$0xf]
        %v1724 = vld [vmem:[#allocation2 + $0x18] sm:$0xff]
        %v1725 = vld [vmem:[#allocation2 + $0x20] sm:$0xf]
        %v1726 = vld [vmem:[#allocation2 + $0x24] sm:$0xff]
        %v1727 = vld [vmem:[#allocation2 + $0x2c] sm:$0xf]
        %v1728 = vld [vmem:[#allocation2 + $0x30] sm:$0xff]
        %v1729 = vld [vmem:[#allocation2 + $0x38] sm:$0xf]
        %v1730 = vld [vmem:[#allocation2 + $0x3c] sm:$0xff]
        %v1731 = vld [vmem:[#allocation2 + $0x44] sm:$0xf]
        %v1732 = vld [vmem:[#allocation2 + $0x48] sm:$0xff]
        %v1733 = vld [vmem:[#allocation2 + $0x50] sm:$0xf]
        %v1734 = vld [vmem:[#allocation9 + $0x180] sm:$0xf]
        %v1735 = vld [vmem:[#allocation9 + $0x184] sm:$0xf]
        %v1736 = vld [vmem:[#allocation9 + $0x188] sm:$0xf]
        %v1737 = vld [vmem:[#allocation9 + $0x18c] sm:$0xf]
        %v1738 = vld [vmem:[#allocation9 + $0x190] sm:$0xf]
        %v1739 = vld [vmem:[#allocation9 + $0x194] sm:$0xf]
        %v1740 = vld [vmem:[#allocation9 + $0x198] sm:$0xf]
        %v1741 = vld [vmem:[#allocation9 + $0x19c] sm:$0xf]
        %v1742 = vld [vmem:[#allocation9 + $0x1a0] sm:$0xf]
        %v1743 = vld [vmem:[#allocation9 + $0x1a4] sm:$0xf]
        %v1744 = vld [vmem:[#allocation9 + $0x1a8] sm:$0xf]
        %v1745 = vld [vmem:[#allocation9 + $0x1ac] sm:$0xf]
        %v1746 = vld [vmem:[#allocation9 + $0x1b0] sm:$0xf]
        %v1747 = vld [vmem:[#allocation9 + $0x1b4] sm:$0xf]
        %v1748 = vld [vmem:[#allocation9 + $0x1b8] sm:$0xf]
        %v1749 = vld [vmem:[#allocation9 + $0x1bc] sm:$0xf]
        %v1750 = vld [vmem:[#allocation9 + $0x1c0] sm:$0xf]
        %v1751 = vld [vmem:[#allocation9 + $0x1c4] sm:$0xf]
        %v1752 = vld [vmem:[#allocation9 + $0x1c8] sm:$0xf]
        %v1753 = vld [vmem:[#allocation9 + $0x1cc] sm:$0xf]
        %v1754 = vld [vmem:[#allocation9 + $0x1d0] sm:$0xf]
        %v1755 = vld [vmem:[#allocation9 + $0x1d4] sm:$0xf]
        %v1756 = vld [vmem:[#allocation9 + $0x1d8] sm:$0xf]
        %v1757 = vld [vmem:[#allocation9 + $0x1dc] sm:$0xf]
        %v1758 = vld [vmem:[#allocation9 + $0x1e0] sm:$0xf]
        %v1759 = vld [vmem:[#allocation9 + $0x1e4] sm:$0xf]
        %v1760 = vld [vmem:[#allocation9 + $0x1e8] sm:$0xf]
        %v1761 = vld [vmem:[#allocation9 + $0x1ec] sm:$0xf]
        %v1762 = vld [vmem:[#allocation9 + $0x1f0] sm:$0xf]
        %v1763 = vld [vmem:[#allocation9 + $0x1f4] sm:$0xf]
        %v1764 = vld [vmem:[#allocation9 + $0x1f8] sm:$0xf]
        %v1765 = vld [vmem:[#allocation9 + $0x1fc] sm:$0xf]
        %v1766 = vld [vmem:[#allocation9 + $0x200] sm:$0xf]
        %v1767 = vld [vmem:[#allocation9 + $0x204] sm:$0xf]
        %v1768 = vld [vmem:[#allocation9 + $0x208] sm:$0xf]
        %v1769 = vld [vmem:[#allocation9 + $0x20c] sm:$0xf]
        %v1770 = vld [vmem:[#allocation9 + $0x210] sm:$0xf]
        %v1771 = vld [vmem:[#allocation9 + $0x214] sm:$0xf]
        %v1772 = vld [vmem:[#allocation9 + $0x218] sm:$0xf]
        %v1773 = vld [vmem:[#allocation9 + $0x21c] sm:$0xf]
        %v1774 = vld [vmem:[#allocation9 + $0x220] sm:$0xf]
        %v1775 = vld [vmem:[#allocation9 + $0x224] sm:$0xf]
        %v1776 = vld [vmem:[#allocation9 + $0x228] sm:$0xf]
        %v1777 = vld [vmem:[#allocation9 + $0x22c] sm:$0xf]
        %v1778 = vld [vmem:[#allocation9 + $0x230] sm:$0xf]
        %v1779 = vld [vmem:[#allocation9 + $0x234] sm:$0xf]
        %v1780 = vld [vmem:[#allocation9 + $0x238] sm:$0xf]
        %v1781 = vld [vmem:[#allocation9 + $0x23c] sm:$0xf]
        %v1782 = vld [vmem:[%s4 + $0x2] sm:$0x1]
        %v1783 = vlaneseq
        %v1784 = vshrl.u32 %v1783, 7
        %v1785 = vsub.s32 0, %v1784
        %v1786 = vrot.slane %v1782, %v1785
        %v1799 = vunpack.c.l.b16 %v1722
        %v1800 = vunpack.c.h.b16 %v1722
        %v1801 = vunpack.c.l.b16 %v1723
        %v1802 = vunpack.c.l.b16 %v1724
        %v1803 = vunpack.c.h.b16 %v1724
        %v1804 = vunpack.c.l.b16 %v1725
        %v1805 = vunpack.c.l.b16 %v1726
        %v1806 = vunpack.c.h.b16 %v1726
        %v1807 = vunpack.c.l.b16 %v1727
        %v1808 = vunpack.c.l.b16 %v1728
        %v1809 = vunpack.c.h.b16 %v1728
        %v1810 = vunpack.c.l.b16 %v1729
        %v1811 = vunpack.c.l.b16 %v1730
        %v1812 = vunpack.c.h.b16 %v1730
        %v1813 = vunpack.c.l.b16 %v1731
        %v1814 = vunpack.c.l.b16 %v1732
        %v1815 = vunpack.c.h.b16 %v1732
        %v1816 = vunpack.c.l.b16 %v1733
        %v1817 = vpack.c.b16 %v1802, %v1799
        %v1818 = vpack.c.b16 %v1803, %v1800
        %v1819 = vpack.c.b16 %v1804, %v1801
        %v1820 = vpack.c.b16 %v1808, %v1805
        %v1821 = vpack.c.b16 %v1809, %v1806
        %v1822 = vpack.c.b16 %v1810, %v1807
        %v1823 = vpack.c.b16 %v1814, %v1811
        %v1824 = vpack.c.b16 %v1815, %v1812
        %v1825 = vpack.c.b16 %v1816, %v1813
        %v1883 = vunpack.c.l.b16 %v1734
        %v1884 = vunpack.c.l.b16 %v1735
        %v1885 = vunpack.c.l.b16 %v1736
        %v1886 = vunpack.c.l.b16 %v1737
        %v1887 = vunpack.c.l.b16 %v1738
        %v1888 = vunpack.c.l.b16 %v1739
        %v1889 = vunpack.c.l.b16 %v1740
        %v1890 = vunpack.c.l.b16 %v1741
        %v1891 = vunpack.c.l.b16 %v1742
        %v1892 = vunpack.c.l.b16 %v1743
        %v1893 = vunpack.c.l.b16 %v1744
        %v1894 = vunpack.c.l.b16 %v1745
        %v1895 = vunpack.c.l.b16 %v1746
        %v1896 = vunpack.c.l.b16 %v1747
        %v1897 = vunpack.c.l.b16 %v1748
        %v1898 = vunpack.c.l.b16 %v1749
        %v1899 = vunpack.c.l.b16 %v1750
        %v1900 = vunpack.c.l.b16 %v1751
        %v1901 = vunpack.c.l.b16 %v1752
        %v1902 = vunpack.c.l.b16 %v1753
        %v1903 = vunpack.c.l.b16 %v1754
        %v1904 = vunpack.c.l.b16 %v1755
        %v1905 = vunpack.c.l.b16 %v1756
        %v1906 = vunpack.c.l.b16 %v1757
        %v1907 = vunpack.c.l.b16 %v1758
        %v1908 = vunpack.c.l.b16 %v1759
        %v1909 = vunpack.c.l.b16 %v1760
        %v1910 = vunpack.c.l.b16 %v1761
        %v1911 = vunpack.c.l.b16 %v1762
        %v1912 = vunpack.c.l.b16 %v1763
        %v1913 = vunpack.c.l.b16 %v1764
        %v1914 = vunpack.c.l.b16 %v1765
        %v1915 = vunpack.c.l.b16 %v1766
        %v1916 = vunpack.c.l.b16 %v1767
        %v1917 = vunpack.c.l.b16 %v1768
        %v1918 = vunpack.c.l.b16 %v1769
        %v1919 = vunpack.c.l.b16 %v1770
        %v1920 = vunpack.c.l.b16 %v1771
        %v1921 = vunpack.c.l.b16 %v1772
        %v1922 = vunpack.c.l.b16 %v1773
        %v1923 = vunpack.c.l.b16 %v1774
        %v1924 = vunpack.c.l.b16 %v1775
        %v1925 = vunpack.c.l.b16 %v1776
        %v1926 = vunpack.c.l.b16 %v1777
        %v1927 = vunpack.c.l.b16 %v1778
        %v1928 = vunpack.c.l.b16 %v1779
        %v1929 = vunpack.c.l.b16 %v1780
        %v1930 = vunpack.c.l.b16 %v1781
        %v1931 = vpack.c.b16 %v1884, %v1883
        %v1932 = vpack.c.b16 %v1886, %v1885
        %v1933 = vpack.c.b16 %v1888, %v1887
        %v1934 = vpack.c.b16 %v1890, %v1889
        %v1935 = vpack.c.b16 %v1892, %v1891
        %v1936 = vpack.c.b16 %v1894, %v1893
        %v1937 = vpack.c.b16 %v1896, %v1895
        %v1938 = vpack.c.b16 %v1898, %v1897
        %v1939 = vpack.c.b16 %v1900, %v1899
        %v1940 = vpack.c.b16 %v1902, %v1901
        %v1941 = vpack.c.b16 %v1904, %v1903
        %v1942 = vpack.c.b16 %v1906, %v1905
        %v1943 = vpack.c.b16 %v1908, %v1907
        %v1944 = vpack.c.b16 %v1910, %v1909
        %v1945 = vpack.c.b16 %v1912, %v1911
        %v1946 = vpack.c.b16 %v1914, %v1913
        %v1947 = vpack.c.b16 %v1916, %v1915
        %v1948 = vpack.c.b16 %v1918, %v1917
        %v1949 = vpack.c.b16 %v1920, %v1919
        %v1950 = vpack.c.b16 %v1922, %v1921
        %v1951 = vpack.c.b16 %v1924, %v1923
        %v1952 = vpack.c.b16 %v1926, %v1925
        %v1953 = vpack.c.b16 %v1928, %v1927
        %v1954 = vpack.c.b16 %v1930, %v1929
        %1979 = vmatprep.subr.bf16.mxu0 0
        %1980 = vmatpush1.bf16.msra.mxu0 %v1938
        %1981 = vmatprep.subr.bf16.mxu0 0
        %1982 = vmatpush1.bf16.msra.mxu0 %v1937
        %1983 = vmatprep.subr.bf16.mxu0 0
        %1984 = vmatpush1.bf16.msra.mxu0 %v1936
        %1985 = vmatprep.subr.bf16.mxu0 0
        %1986 = vmatpush1.bf16.msra.mxu0 %v1935
        %1987 = vmatprep.subr.bf16.mxu0 0
        %1988 = vmatpush1.bf16.msra.mxu0 %v1934
        %1989 = vmatprep.subr.bf16.mxu0 0
        %1990 = vmatpush1.bf16.msra.mxu0 %v1933
        %1991 = vmatprep.subr.bf16.mxu0 0
        %1992 = vmatpush1.bf16.msra.mxu0 %v1932
        %1993 = vmatprep.subr.bf16.mxu0 0
        %1994 = vmatpush1.bf16.msra.mxu0 %v1931
        %1995 = vmatprep.subr.bf16.mxu0 0
        %1996 = vmatpush2.bf16.msra.mxu0 %v1946
        %1997 = vmatprep.subr.bf16.mxu0 0
        %1998 = vmatpush2.bf16.msra.mxu0 %v1945
        %1999 = vmatprep.subr.bf16.mxu0 0
        %2000 = vmatpush2.bf16.msra.mxu0 %v1944
        %2001 = vmatprep.subr.bf16.mxu0 0
        %2002 = vmatpush2.bf16.msra.mxu0 %v1943
        %2003 = vmatprep.subr.bf16.mxu0 0
        %2004 = vmatpush2.bf16.msra.mxu0 %v1942
        %2005 = vmatprep.subr.bf16.mxu0 0
        %2006 = vmatpush2.bf16.msra.mxu0 %v1941
        %2007 = vmatprep.subr.bf16.mxu0 0
        %2008 = vmatpush2.bf16.msra.mxu0 %v1940
        %2009 = vmatprep.subr.bf16.mxu0 0
        %2010 = vmatpush2.bf16.msra.mxu0 %v1939
        %2011 = vmatprep.mubr.bf16.mxu0 %v1818
        %2012 = vmatmul.mubr.bf16.gmra.mxu0 %v1817
        %v2013 = vpop.f32.mrf.mxu0
        %v2014 = vadd.f32 %v1786, %v2013
        %v2015 = vpop.f32.mrf.mxu0
        %v2016 = vpop.f32.mrf.mxu0
        %v2017 = vadd.f32 %v1786, %v2016
        %v2018 = vpop.f32.mrf.mxu0
        %2019 = vmatprep.mubr.bf16.mxu0 %v1821
        %2020 = vmatmul.mubr.bf16.gmra.mxu0 %v1820
        %v2021 = vpop.f32.mrf.mxu0
        %v2022 = vadd.f32 %v1786, %v2021
        %v2023 = vpop.f32.mrf.mxu0
        %v2024 = vpop.f32.mrf.mxu0
        %v2025 = vadd.f32 %v1786, %v2024
        %v2026 = vpop.f32.mrf.mxu0
        %2027 = vmatprep.mubr.bf16.mxu0 %v1824
        %2028 = vmatmul.mubr.bf16.gmra.mxu0 %v1823
        %v2029 = vpop.f32.mrf.mxu0
        %v2030 = vadd.f32 %v1786, %v2029
        %v2031 = vpop.f32.mrf.mxu0
        %v2032 = vpop.f32.mrf.mxu0
        %v2033 = vadd.f32 %v1786, %v2032
        %v2034 = vpop.f32.mrf.mxu0
        %2035 = vdwg.mxu0
        %2036 = vmatprep.subr.bf16.mxu0 0
        %2037 = vmatpush1.bf16.msra.mxu0 %v1954
        %2038 = vmatprep.subr.bf16.mxu0 0
        %2039 = vmatpush1.bf16.msra.mxu0 %v1953
        %2040 = vmatprep.subr.bf16.mxu0 0
        %2041 = vmatpush1.bf16.msra.mxu0 %v1952
        %2042 = vmatprep.subr.bf16.mxu0 0
        %2043 = vmatpush1.bf16.msra.mxu0 %v1951
        %2044 = vmatprep.subr.bf16.mxu0 0
        %2045 = vmatpush1.bf16.msra.mxu0 %v1950
        %2046 = vmatprep.subr.bf16.mxu0 0
        %2047 = vmatpush1.bf16.msra.mxu0 %v1949
        %2048 = vmatprep.subr.bf16.mxu0 0
        %2049 = vmatpush1.bf16.msra.mxu0 %v1948
        %2050 = vmatprep.subr.bf16.mxu0 0
        %2051 = vmatpush1.bf16.msra.mxu0 %v1947
        %2052 = vmatprep.subr.bf16.mxu0 0
        %2053 = vmatpush2.bf16.msra.mxu0 0
        %2054 = vmatprep.subr.bf16.mxu0 0
        %2055 = vmatpush2.bf16.msra.mxu0 0
        %2056 = vmatprep.subr.bf16.mxu0 0
        %2057 = vmatpush2.bf16.msra.mxu0 0
        %2058 = vmatprep.subr.bf16.mxu0 0
        %2059 = vmatpush2.bf16.msra.mxu0 0
        %2060 = vmatprep.subr.bf16.mxu0 0
        %2061 = vmatpush2.bf16.msra.mxu0 0
        %2062 = vmatprep.subr.bf16.mxu0 0
        %2063 = vmatpush2.bf16.msra.mxu0 0
        %2064 = vmatprep.subr.bf16.mxu0 0
        %2065 = vmatpush2.bf16.msra.mxu0 0
        %2066 = vmatprep.subr.bf16.mxu0 0
        %2067 = vmatpush2.bf16.msra.mxu0 0
        %2068 = vmatprep.mubr.bf16.mxu0 0
        %2069 = vmatmul.mubr.bf16.gmra.mxu0 %v1819
        %v2070 = vpop.f32.mrf.mxu0
        %v2071 = vadd.f32 %v2014, %v2070
        %v2072 = vpop.f32.mrf.mxu0
        %v2073 = vpop.f32.mrf.mxu0
        %v2074 = vadd.f32 %v2017, %v2073
        %v2075 = vpop.f32.mrf.mxu0
        %2076 = vmatprep.mubr.bf16.mxu0 0
        %2077 = vmatmul.mubr.bf16.gmra.mxu0 %v1822
        %v2078 = vpop.f32.mrf.mxu0
        %v2079 = vadd.f32 %v2022, %v2078
        %v2080 = vpop.f32.mrf.mxu0
        %v2081 = vpop.f32.mrf.mxu0
        %v2082 = vadd.f32 %v2025, %v2081
        %v2083 = vpop.f32.mrf.mxu0
        %2084 = vmatprep.mubr.bf16.mxu0 0
        %2085 = vmatmul.mubr.bf16.gmra.mxu0 %v1825
        %v2086 = vpop.f32.mrf.mxu0
        %v2087 = vadd.f32 %v2030, %v2086
        %v2088 = vpop.f32.mrf.mxu0
        %v2089 = vpop.f32.mrf.mxu0
        %v2090 = vadd.f32 %v2033, %v2089
        %v2091 = vpop.f32.mrf.mxu0
        %2092 = vdwg.mxu0
        %v2093 = vsel %vm1025, %v2071, 0.0
        %v2094 = vsel %vm1026, %v2074, 0.0
        %v2095 = vsel %vm1027, %v2079, 0.0
        %v2096 = vsel %vm1028, %v2082, 0.0
        %v2097 = vsel %vm1029, %v2087, 0.0
        %v2098 = vsel %vm1030, %v2090, 0.0
        %vm2099 = vcmp.gt.f32.partialorder %v2093, 0.0
        %vm2100 = vcmp.gt.f32.partialorder %v2094, 0.0
        %vm2101 = vcmp.gt.f32.partialorder %v2095, 0.0
        %vm2102 = vcmp.gt.f32.partialorder %v2096, 0.0
        %vm2103 = vcmp.gt.f32.partialorder %v2097, 0.0
        %vm2104 = vcmp.gt.f32.partialorder %v2098, 0.0
        %v2105 = vmul.f32 %v2093, 0.01
        %v2106 = vmul.f32 %v2094, 0.01
        %v2107 = vmul.f32 %v2095, 0.01
        %v2108 = vmul.f32 %v2096, 0.01
        %v2109 = vmul.f32 %v2097, 0.01
        %v2110 = vmul.f32 %v2098, 0.01
        %v2111 = vsel %vm2099, %v2093, %v2105
        %v2112 = vsel %vm2100, %v2094, %v2106
        %v2113 = vsel %vm2101, %v2095, %v2107
        %v2114 = vsel %vm2102, %v2096, %v2108
        %v2115 = vsel %vm2103, %v2097, %v2109
        %v2116 = vsel %vm2104, %v2098, %v2110
        %v2117 = vpack.c.bf16 %v2112, %v2111
        %v2118 = vpack.c.bf16 %v2114, %v2113
        %v2119 = vpack.c.bf16 %v2116, %v2115
        %v2123 = vunpack.c.l.b16 %v2117
        %v2124 = vunpack.c.h.b16 %v2117
        %v2125 = vunpack.c.l.b16 %v2118
        %v2126 = vunpack.c.h.b16 %v2118
        %v2127 = vunpack.c.l.b16 %v2119
        %v2128 = vunpack.c.h.b16 %v2119
        %v2129 = vpack.c.b16 %v2123, %v2123
        %v2130 = vpack.c.b16 %v2124, %v2124
        %v2131 = vpack.c.b16 %v2125, %v2125
        %v2132 = vpack.c.b16 %v2126, %v2126
        %v2133 = vpack.c.b16 %v2127, %v2127
        %v2134 = vpack.c.b16 %v2128, %v2128
        %v2136 = vshrl.u32 %v2129, 16
        %v2138 = vrot.slane %v2136, 7
        %v2139 = vshll.u32 %v2129, 16
        %v2141 = vor.u32 %v2138, %v2139
        %v2142 = vrot.slane %v2138, 4
        %v2144 = vshrl.u32 %v2130, 16
        %v2146 = vrot.slane %v2144, 7
        %v2147 = vshll.u32 %v2130, 16
        %v2149 = vor.u32 %v2146, %v2147
        %v2150 = vsel %vm505, %v2142, %v2149
        %v2151 = vrot.slane %v2146, 4
        %v2153 = vshrl.u32 %v2131, 16
        %v2155 = vrot.slane %v2153, 7
        %v2156 = vshll.u32 %v2131, 16
        %v2158 = vor.u32 %v2155, %v2156
        %v2159 = vsel %vm505, %v2151, %v2158
        %v2160 = vrot.slane %v2155, 4
        %v2162 = vshrl.u32 %v2132, 16
        %v2164 = vrot.slane %v2162, 7
        %v2165 = vshll.u32 %v2132, 16
        %v2167 = vor.u32 %v2164, %v2165
        %v2168 = vsel %vm505, %v2160, %v2167
        %v2169 = vrot.slane %v2164, 4
        %v2171 = vshrl.u32 %v2133, 16
        %v2173 = vrot.slane %v2171, 7
        %v2174 = vshll.u32 %v2133, 16
        %v2176 = vor.u32 %v2173, %v2174
        %v2177 = vsel %vm505, %v2169, %v2176
        %v2178 = vrot.slane %v2173, 4
        %v2180 = vshrl.u32 %v2134, 16
        %v2182 = vrot.slane %v2180, 7
        %v2183 = vshll.u32 %v2134, 16
        %v2185 = vor.u32 %v2182, %v2183
        %v2186 = vsel %vm505, %v2178, %v2185
        %v2187 = vrot.slane %v2182, 4
        %v2195 = vld [vmem:[#allocation2 + $0xc] sm:$0xf]
        %v2196 = vsel %vm568, %v2141, %v2195
        %2197 = vst [vmem:[#allocation2 + $0xc] sm:$0xf] %v2196
        %2198 = vst [vmem:[#allocation2 + $0x18] sm:$0xf] %v2150
        %2199 = vst [vmem:[#allocation2 + $0x24] sm:$0xf] %v2159
        %2200 = vst [vmem:[#allocation2 + $0x30] sm:$0xf] %v2168
        %2201 = vst [vmem:[#allocation2 + $0x3c] sm:$0xf] %v2177
        %2202 = vst [vmem:[#allocation2 + $0x48] sm:$0xf] %v2186
        %v2203 = vld [vmem:[#allocation2 + $0x54] sm:$0x1]
        %v2204 = vsel %vm578, %v2187, %v2203
        %2205 = vst [vmem:[#allocation2 + $0x54] sm:$0x1] %v2204
        %2212 = vst [vmem:[#allocation2 + $0x10] sm:$0xf] %v2129
        %2213 = vst [vmem:[#allocation2 + $0x1c] sm:$0xf] %v2130
        %2214 = vst [vmem:[#allocation2 + $0x28] sm:$0xf] %v2131
        %2215 = vst [vmem:[#allocation2 + $0x34] sm:$0xf] %v2132
        %2216 = vst [vmem:[#allocation2 + $0x40] sm:$0xf] %v2133
        %2217 = vst [vmem:[#allocation2 + $0x4c] sm:$0xf] %v2134
        %v2218 = vrot.slane %v2139, 5
        %v2219 = vrot.slane %v2136, 4
        %v2220 = vor.u32 %v2219, %v2218
        %v2221 = vrot.slane %v2220, 4
        %v2222 = vrot.slane %v2147, 5
        %v2223 = vsel %vm596, %v2221, %v2222
        %v2224 = vrot.slane %v2144, 4
        %v2225 = vor.u32 %v2224, %v2222
        %v2226 = vrot.slane %v2225, 4
        %v2227 = vrot.slane %v2156, 5
        %v2228 = vsel %vm596, %v2226, %v2227
        %v2229 = vrot.slane %v2153, 4
        %v2230 = vor.u32 %v2229, %v2227
        %v2231 = vrot.slane %v2230, 4
        %v2232 = vrot.slane %v2165, 5
        %v2233 = vsel %vm596, %v2231, %v2232
        %v2234 = vrot.slane %v2162, 4
        %v2235 = vor.u32 %v2234, %v2232
        %v2236 = vrot.slane %v2235, 4
        %v2237 = vrot.slane %v2174, 5
        %v2238 = vsel %vm596, %v2236, %v2237
        %v2239 = vrot.slane %v2171, 4
        %v2240 = vor.u32 %v2239, %v2237
        %v2241 = vrot.slane %v2240, 4
        %v2242 = vrot.slane %v2183, 5
        %v2243 = vsel %vm596, %v2241, %v2242
        %v2244 = vrot.slane %v2180, 4
        %v2245 = vor.u32 %v2244, %v2242
        %v2246 = vrot.slane %v2245, 4
        %v2254 = vld [vmem:[#allocation2 + $0x8] sm:$0x8]
        %v2255 = vsel %vm635, %v2218, %v2254
        %2256 = vst [vmem:[#allocation2 + $0x8] sm:$0x8] %v2255
        %2257 = vst [vmem:[#allocation2 + $0x14] sm:$0xf] %v2223
        %2258 = vst [vmem:[#allocation2 + $0x20] sm:$0xf] %v2228
        %2259 = vst [vmem:[#allocation2 + $0x2c] sm:$0xf] %v2233
        %2260 = vst [vmem:[#allocation2 + $0x38] sm:$0xf] %v2238
        %2261 = vst [vmem:[#allocation2 + $0x44] sm:$0xf] %v2243
        %v2262 = vld [vmem:[#allocation2 + $0x50] sm:$0xf]
        %v2263 = vsel %vm644, %v2246, %v2262
        %2264 = vst [vmem:[#allocation2 + $0x50] sm:$0xf] %v2263
        %v2265 = vld [vmem:[#allocation2 + $0xc] sm:$0xff]
        %v2266 = vld [vmem:[#allocation2 + $0x14] sm:$0xf]
        %v2267 = vld [vmem:[#allocation2 + $0x18] sm:$0xff]
        %v2268 = vld [vmem:[#allocation2 + $0x20] sm:$0xf]
        %v2269 = vld [vmem:[#allocation2 + $0x24] sm:$0xff]
        %v2270 = vld [vmem:[#allocation2 + $0x2c] sm:$0xf]
        %v2271 = vld [vmem:[#allocation2 + $0x30] sm:$0xff]
        %v2272 = vld [vmem:[#allocation2 + $0x38] sm:$0xf]
        %v2273 = vld [vmem:[#allocation2 + $0x3c] sm:$0xff]
        %v2274 = vld [vmem:[#allocation2 + $0x44] sm:$0xf]
        %v2275 = vld [vmem:[#allocation2 + $0x48] sm:$0xff]
        %v2276 = vld [vmem:[#allocation2 + $0x50] sm:$0xf]
        %v2277 = vld [vmem:[#allocation9 + $0x240] sm:$0xf]
        %v2278 = vld [vmem:[#allocation9 + $0x244] sm:$0xf]
        %v2279 = vld [vmem:[#allocation9 + $0x248] sm:$0xf]
        %v2280 = vld [vmem:[#allocation9 + $0x24c] sm:$0xf]
        %v2281 = vld [vmem:[#allocation9 + $0x250] sm:$0xf]
        %v2282 = vld [vmem:[#allocation9 + $0x254] sm:$0xf]
        %v2283 = vld [vmem:[#allocation9 + $0x258] sm:$0xf]
        %v2284 = vld [vmem:[#allocation9 + $0x25c] sm:$0xf]
        %v2285 = vld [vmem:[#allocation9 + $0x260] sm:$0xf]
        %v2286 = vld [vmem:[#allocation9 + $0x264] sm:$0xf]
        %v2287 = vld [vmem:[#allocation9 + $0x268] sm:$0xf]
        %v2288 = vld [vmem:[#allocation9 + $0x26c] sm:$0xf]
        %v2289 = vld [vmem:[#allocation9 + $0x270] sm:$0xf]
        %v2290 = vld [vmem:[#allocation9 + $0x274] sm:$0xf]
        %v2291 = vld [vmem:[#allocation9 + $0x278] sm:$0xf]
        %v2292 = vld [vmem:[#allocation9 + $0x27c] sm:$0xf]
        %v2293 = vld [vmem:[#allocation9 + $0x280] sm:$0xf]
        %v2294 = vld [vmem:[#allocation9 + $0x284] sm:$0xf]
        %v2295 = vld [vmem:[#allocation9 + $0x288] sm:$0xf]
        %v2296 = vld [vmem:[#allocation9 + $0x28c] sm:$0xf]
        %v2297 = vld [vmem:[#allocation9 + $0x290] sm:$0xf]
        %v2298 = vld [vmem:[#allocation9 + $0x294] sm:$0xf]
        %v2299 = vld [vmem:[#allocation9 + $0x298] sm:$0xf]
        %v2300 = vld [vmem:[#allocation9 + $0x29c] sm:$0xf]
        %v2301 = vld [vmem:[#allocation9 + $0x2a0] sm:$0xf]
        %v2302 = vld [vmem:[#allocation9 + $0x2a4] sm:$0xf]
        %v2303 = vld [vmem:[#allocation9 + $0x2a8] sm:$0xf]
        %v2304 = vld [vmem:[#allocation9 + $0x2ac] sm:$0xf]
        %v2305 = vld [vmem:[#allocation9 + $0x2b0] sm:$0xf]
        %v2306 = vld [vmem:[#allocation9 + $0x2b4] sm:$0xf]
        %v2307 = vld [vmem:[#allocation9 + $0x2b8] sm:$0xf]
        %v2308 = vld [vmem:[#allocation9 + $0x2bc] sm:$0xf]
        %v2309 = vld [vmem:[#allocation9 + $0x2c0] sm:$0xf]
        %v2310 = vld [vmem:[#allocation9 + $0x2c4] sm:$0xf]
        %v2311 = vld [vmem:[#allocation9 + $0x2c8] sm:$0xf]
        %v2312 = vld [vmem:[#allocation9 + $0x2cc] sm:$0xf]
        %v2313 = vld [vmem:[#allocation9 + $0x2d0] sm:$0xf]
        %v2314 = vld [vmem:[#allocation9 + $0x2d4] sm:$0xf]
        %v2315 = vld [vmem:[#allocation9 + $0x2d8] sm:$0xf]
        %v2316 = vld [vmem:[#allocation9 + $0x2dc] sm:$0xf]
        %v2317 = vld [vmem:[#allocation9 + $0x2e0] sm:$0xf]
        %v2318 = vld [vmem:[#allocation9 + $0x2e4] sm:$0xf]
        %v2319 = vld [vmem:[#allocation9 + $0x2e8] sm:$0xf]
        %v2320 = vld [vmem:[#allocation9 + $0x2ec] sm:$0xf]
        %v2321 = vld [vmem:[#allocation9 + $0x2f0] sm:$0xf]
        %v2322 = vld [vmem:[#allocation9 + $0x2f4] sm:$0xf]
        %v2323 = vld [vmem:[#allocation9 + $0x2f8] sm:$0xf]
        %v2324 = vld [vmem:[#allocation9 + $0x2fc] sm:$0xf]
        %v2325 = vld [vmem:[%s4 + $0x3] sm:$0x1]
        %v2326 = vlaneseq
        %v2327 = vshrl.u32 %v2326, 7
        %v2328 = vsub.s32 0, %v2327
        %v2329 = vrot.slane %v2325, %v2328
        %v2342 = vunpack.c.l.b16 %v2265
        %v2343 = vunpack.c.h.b16 %v2265
        %v2344 = vunpack.c.l.b16 %v2266
        %v2345 = vunpack.c.l.b16 %v2267
        %v2346 = vunpack.c.h.b16 %v2267
        %v2347 = vunpack.c.l.b16 %v2268
        %v2348 = vunpack.c.l.b16 %v2269
        %v2349 = vunpack.c.h.b16 %v2269
        %v2350 = vunpack.c.l.b16 %v2270
        %v2351 = vunpack.c.l.b16 %v2271
        %v2352 = vunpack.c.h.b16 %v2271
        %v2353 = vunpack.c.l.b16 %v2272
        %v2354 = vunpack.c.l.b16 %v2273
        %v2355 = vunpack.c.h.b16 %v2273
        %v2356 = vunpack.c.l.b16 %v2274
        %v2357 = vunpack.c.l.b16 %v2275
        %v2358 = vunpack.c.h.b16 %v2275
        %v2359 = vunpack.c.l.b16 %v2276
        %v2360 = vpack.c.b16 %v2345, %v2342
        %v2361 = vpack.c.b16 %v2346, %v2343
        %v2362 = vpack.c.b16 %v2347, %v2344
        %v2363 = vpack.c.b16 %v2351, %v2348
        %v2364 = vpack.c.b16 %v2352, %v2349
        %v2365 = vpack.c.b16 %v2353, %v2350
        %v2366 = vpack.c.b16 %v2357, %v2354
        %v2367 = vpack.c.b16 %v2358, %v2355
        %v2368 = vpack.c.b16 %v2359, %v2356
        %v2426 = vunpack.c.l.b16 %v2277
        %v2427 = vunpack.c.l.b16 %v2278
        %v2428 = vunpack.c.l.b16 %v2279
        %v2429 = vunpack.c.l.b16 %v2280
        %v2430 = vunpack.c.l.b16 %v2281
        %v2431 = vunpack.c.l.b16 %v2282
        %v2432 = vunpack.c.l.b16 %v2283
        %v2433 = vunpack.c.l.b16 %v2284
        %v2434 = vunpack.c.l.b16 %v2285
        %v2435 = vunpack.c.l.b16 %v2286
        %v2436 = vunpack.c.l.b16 %v2287
        %v2437 = vunpack.c.l.b16 %v2288
        %v2438 = vunpack.c.l.b16 %v2289
        %v2439 = vunpack.c.l.b16 %v2290
        %v2440 = vunpack.c.l.b16 %v2291
        %v2441 = vunpack.c.l.b16 %v2292
        %v2442 = vunpack.c.l.b16 %v2293
        %v2443 = vunpack.c.l.b16 %v2294
        %v2444 = vunpack.c.l.b16 %v2295
        %v2445 = vunpack.c.l.b16 %v2296
        %v2446 = vunpack.c.l.b16 %v2297
        %v2447 = vunpack.c.l.b16 %v2298
        %v2448 = vunpack.c.l.b16 %v2299
        %v2449 = vunpack.c.l.b16 %v2300
        %v2450 = vunpack.c.l.b16 %v2301
        %v2451 = vunpack.c.l.b16 %v2302
        %v2452 = vunpack.c.l.b16 %v2303
        %v2453 = vunpack.c.l.b16 %v2304
        %v2454 = vunpack.c.l.b16 %v2305
        %v2455 = vunpack.c.l.b16 %v2306
        %v2456 = vunpack.c.l.b16 %v2307
        %v2457 = vunpack.c.l.b16 %v2308
        %v2458 = vunpack.c.l.b16 %v2309
        %v2459 = vunpack.c.l.b16 %v2310
        %v2460 = vunpack.c.l.b16 %v2311
        %v2461 = vunpack.c.l.b16 %v2312
        %v2462 = vunpack.c.l.b16 %v2313
        %v2463 = vunpack.c.l.b16 %v2314
        %v2464 = vunpack.c.l.b16 %v2315
        %v2465 = vunpack.c.l.b16 %v2316
        %v2466 = vunpack.c.l.b16 %v2317
        %v2467 = vunpack.c.l.b16 %v2318
        %v2468 = vunpack.c.l.b16 %v2319
        %v2469 = vunpack.c.l.b16 %v2320
        %v2470 = vunpack.c.l.b16 %v2321
        %v2471 = vunpack.c.l.b16 %v2322
        %v2472 = vunpack.c.l.b16 %v2323
        %v2473 = vunpack.c.l.b16 %v2324
        %v2474 = vpack.c.b16 %v2427, %v2426
        %v2475 = vpack.c.b16 %v2429, %v2428
        %v2476 = vpack.c.b16 %v2431, %v2430
        %v2477 = vpack.c.b16 %v2433, %v2432
        %v2478 = vpack.c.b16 %v2435, %v2434
        %v2479 = vpack.c.b16 %v2437, %v2436
        %v2480 = vpack.c.b16 %v2439, %v2438
        %v2481 = vpack.c.b16 %v2441, %v2440
        %v2482 = vpack.c.b16 %v2443, %v2442
        %v2483 = vpack.c.b16 %v2445, %v2444
        %v2484 = vpack.c.b16 %v2447, %v2446
        %v2485 = vpack.c.b16 %v2449, %v2448
        %v2486 = vpack.c.b16 %v2451, %v2450
        %v2487 = vpack.c.b16 %v2453, %v2452
        %v2488 = vpack.c.b16 %v2455, %v2454
        %v2489 = vpack.c.b16 %v2457, %v2456
        %v2490 = vpack.c.b16 %v2459, %v2458
        %v2491 = vpack.c.b16 %v2461, %v2460
        %v2492 = vpack.c.b16 %v2463, %v2462
        %v2493 = vpack.c.b16 %v2465, %v2464
        %v2494 = vpack.c.b16 %v2467, %v2466
        %v2495 = vpack.c.b16 %v2469, %v2468
        %v2496 = vpack.c.b16 %v2471, %v2470
        %v2497 = vpack.c.b16 %v2473, %v2472
        %2522 = vmatprep.subr.bf16.mxu0 0
        %2523 = vmatpush1.bf16.msra.mxu0 %v2481
        %2524 = vmatprep.subr.bf16.mxu0 0
        %2525 = vmatpush1.bf16.msra.mxu0 %v2480
        %2526 = vmatprep.subr.bf16.mxu0 0
        %2527 = vmatpush1.bf16.msra.mxu0 %v2479
        %2528 = vmatprep.subr.bf16.mxu0 0
        %2529 = vmatpush1.bf16.msra.mxu0 %v2478
        %2530 = vmatprep.subr.bf16.mxu0 0
        %2531 = vmatpush1.bf16.msra.mxu0 %v2477
        %2532 = vmatprep.subr.bf16.mxu0 0
        %2533 = vmatpush1.bf16.msra.mxu0 %v2476
        %2534 = vmatprep.subr.bf16.mxu0 0
        %2535 = vmatpush1.bf16.msra.mxu0 %v2475
        %2536 = vmatprep.subr.bf16.mxu0 0
        %2537 = vmatpush1.bf16.msra.mxu0 %v2474
        %2538 = vmatprep.subr.bf16.mxu0 0
        %2539 = vmatpush2.bf16.msra.mxu0 %v2489
        %2540 = vmatprep.subr.bf16.mxu0 0
        %2541 = vmatpush2.bf16.msra.mxu0 %v2488
        %2542 = vmatprep.subr.bf16.mxu0 0
        %2543 = vmatpush2.bf16.msra.mxu0 %v2487
        %2544 = vmatprep.subr.bf16.mxu0 0
        %2545 = vmatpush2.bf16.msra.mxu0 %v2486
        %2546 = vmatprep.subr.bf16.mxu0 0
        %2547 = vmatpush2.bf16.msra.mxu0 %v2485
        %2548 = vmatprep.subr.bf16.mxu0 0
        %2549 = vmatpush2.bf16.msra.mxu0 %v2484
        %2550 = vmatprep.subr.bf16.mxu0 0
        %2551 = vmatpush2.bf16.msra.mxu0 %v2483
        %2552 = vmatprep.subr.bf16.mxu0 0
        %2553 = vmatpush2.bf16.msra.mxu0 %v2482
        %2554 = vmatprep.mubr.bf16.mxu0 %v2361
        %2555 = vmatmul.mubr.bf16.gmra.mxu0 %v2360
        %v2556 = vpop.f32.mrf.mxu0
        %v2557 = vpop.f32.mrf.mxu0
        %v2558 = vpop.f32.mrf.mxu0
        %v2559 = vadd.f32 %v2329, %v2558
        %v2560 = vpop.f32.mrf.mxu0
        %2561 = vmatprep.mubr.bf16.mxu0 %v2364
        %2562 = vmatmul.mubr.bf16.gmra.mxu0 %v2363
        %v2563 = vpop.f32.mrf.mxu0
        %v2564 = vadd.f32 %v2329, %v2563
        %v2565 = vpop.f32.mrf.mxu0
        %v2566 = vpop.f32.mrf.mxu0
        %v2567 = vadd.f32 %v2329, %v2566
        %v2568 = vpop.f32.mrf.mxu0
        %2569 = vmatprep.mubr.bf16.mxu0 %v2367
        %2570 = vmatmul.mubr.bf16.gmra.mxu0 %v2366
        %v2571 = vpop.f32.mrf.mxu0
        %v2572 = vadd.f32 %v2329, %v2571
        %v2573 = vpop.f32.mrf.mxu0
        %v2574 = vpop.f32.mrf.mxu0
        %v2575 = vpop.f32.mrf.mxu0
        %2576 = vdwg.mxu0
        %2577 = vmatprep.subr.bf16.mxu0 0
        %2578 = vmatpush1.bf16.msra.mxu0 %v2497
        %2579 = vmatprep.subr.bf16.mxu0 0
        %2580 = vmatpush1.bf16.msra.mxu0 %v2496
        %2581 = vmatprep.subr.bf16.mxu0 0
        %2582 = vmatpush1.bf16.msra.mxu0 %v2495
        %2583 = vmatprep.subr.bf16.mxu0 0
        %2584 = vmatpush1.bf16.msra.mxu0 %v2494
        %2585 = vmatprep.subr.bf16.mxu0 0
        %2586 = vmatpush1.bf16.msra.mxu0 %v2493
        %2587 = vmatprep.subr.bf16.mxu0 0
        %2588 = vmatpush1.bf16.msra.mxu0 %v2492
        %2589 = vmatprep.subr.bf16.mxu0 0
        %2590 = vmatpush1.bf16.msra.mxu0 %v2491
        %2591 = vmatprep.subr.bf16.mxu0 0
        %2592 = vmatpush1.bf16.msra.mxu0 %v2490
        %2593 = vmatprep.subr.bf16.mxu0 0
        %2594 = vmatpush2.bf16.msra.mxu0 0
        %2595 = vmatprep.subr.bf16.mxu0 0
        %2596 = vmatpush2.bf16.msra.mxu0 0
        %2597 = vmatprep.subr.bf16.mxu0 0
        %2598 = vmatpush2.bf16.msra.mxu0 0
        %2599 = vmatprep.subr.bf16.mxu0 0
        %2600 = vmatpush2.bf16.msra.mxu0 0
        %2601 = vmatprep.subr.bf16.mxu0 0
        %2602 = vmatpush2.bf16.msra.mxu0 0
        %2603 = vmatprep.subr.bf16.mxu0 0
        %2604 = vmatpush2.bf16.msra.mxu0 0
        %2605 = vmatprep.subr.bf16.mxu0 0
        %2606 = vmatpush2.bf16.msra.mxu0 0
        %2607 = vmatprep.subr.bf16.mxu0 0
        %2608 = vmatpush2.bf16.msra.mxu0 0
        %2609 = vmatprep.mubr.bf16.mxu0 0
        %2610 = vmatmul.mubr.bf16.gmra.mxu0 %v2362
        %v2611 = vpop.f32.mrf.mxu0
        %v2612 = vpop.f32.mrf.mxu0
        %v2613 = vpop.f32.mrf.mxu0
        %v2614 = vadd.f32 %v2559, %v2613
        %v2615 = vpop.f32.mrf.mxu0
        %2616 = vmatprep.mubr.bf16.mxu0 0
        %2617 = vmatmul.mubr.bf16.gmra.mxu0 %v2365
        %v2618 = vpop.f32.mrf.mxu0
        %v2619 = vadd.f32 %v2564, %v2618
        %v2620 = vpop.f32.mrf.mxu0
        %v2621 = vpop.f32.mrf.mxu0
        %v2622 = vadd.f32 %v2567, %v2621
        %v2623 = vpop.f32.mrf.mxu0
        %2624 = vmatprep.mubr.bf16.mxu0 0
        %2625 = vmatmul.mubr.bf16.gmra.mxu0 %v2368
        %v2626 = vpop.f32.mrf.mxu0
        %v2627 = vadd.f32 %v2572, %v2626
        %v2628 = vpop.f32.mrf.mxu0
        %v2629 = vpop.f32.mrf.mxu0
        %v2630 = vpop.f32.mrf.mxu0
        %2631 = vdwg.mxu0
        %v2632 = vsel %vm1026, %v2614, 0.0
        %v2633 = vsel %vm1027, %v2619, 0.0
        %v2634 = vsel %vm1028, %v2622, 0.0
        %v2635 = vsel %vm1029, %v2627, 0.0
        %v2636 = vadd.f32 %v1530, %v2632
        %v2637 = vadd.f32 %v1531, %v2633
        %v2638 = vadd.f32 %v1532, %v2634
        %v2639 = vadd.f32 %v1533, %v2635
        %v2640 = vpack.c.bf16 %v2637, %v2636
        %v2641 = vpack.c.bf16 %v2639, %v2638
        %v2644 = vunpack.c.l.b16 %v2640
        %v2645 = vunpack.c.h.b16 %v2640
        %v2646 = vunpack.c.l.b16 %v2641
        %v2647 = vunpack.c.h.b16 %v2641
        %v2648 = vpack.c.b16 %v2644, %v2644
        %v2649 = vpack.c.b16 %v2645, %v2645
        %v2650 = vpack.c.b16 %v2646, %v2646
        %v2651 = vpack.c.b16 %v2647, %v2647
        %2656 = vst [vmem:[%s378] sm:$0xf] %v2648
        %2657 = vst [vmem:[%s378 + $0x4] sm:$0xf] %v2649
        %2658 = vst [vmem:[%s378 + $0x8] sm:$0xf] %v2650
        %2659 = vst [vmem:[%s378 + $0xc] sm:$0xf] %v2651
        %s2660 = sand.u32 %s186, 1
        %s2661 = scalar_lea.sflag [#allocation5], %s2660
        %s2662 = sand.u32 %s186, 1
        %s2663 = smul.addr %s2662, 16
        %s2664 = scalar_lea.vmem [#allocation11], %s2663
        // Predicated region
        $region57: #{tpu_custom_call.1} parent=39 // pred_check
          %p2665 = pneg %p196
        $region58: #{tpu_custom_call.1} parent=39 // pred_check_branch
          %2667 = sbr.rel (%p2665) target = $region60
        $region59: #{tpu_custom_call.1} parent=39 // pred_region
          %s2668 = smul.u32 4, %s31
          %s2670 = ssub.s32 256, 256
          %2671 = vsyncadd %s2661, %s2670
          %s2672 = smul.addr %s30, 4
          %s2673 = sadd.s32 %s2668, %s2672
          %s2674 = smul.addr %s2673, 64
          %s2675 = scalar_lea.hbm %s5, %s2674
          %s2676 = sshll.u32 %s2664, 4
          %s2677 = int_to_ptr.vmem [resolvable:$true] %s2676
          %2682 = dma.vmem_to_hbm [thread:$0]  %s2677, 256, %s2675, %s2661, 64, 64, 4
        $region60: #{tpu_custom_call.1} parent=39 // pred_fallthru
          _
      $region40: #{tpu_custom_call.1} parent=5 // pred_fallthru
        _
      %p2683 = scmp.le.s32.totalorder 2, %s21
      // Predicated region
      $region61: #{tpu_custom_call.1} parent=5 // pred_check
        %p2684 = pneg %p2683
      $region62: #{tpu_custom_call.1} parent=5 // pred_check_branch
        %2686 = sbr.rel (%p2684) target = $region64
      $region63: #{tpu_custom_call.1} parent=5 // pred_region
        %s2687 = ssub.s32 %s21, 2
        // Predicated region
        $region65: #{tpu_custom_call.1} parent=63 // pred_check
          %p2688 = pneg %p202
        $region66: #{tpu_custom_call.1} parent=63 // pred_check_branch
          %2690 = sbr.rel (%p2688) target = $region68
        $region67: #{tpu_custom_call.1} parent=63 // pred_region
          %s2691 = sand.u32 %s187, 1
          %s2692 = scalar_lea.sflag [#allocation5], %s2691
          %s2693 = sand.u32 %s187, 1
          %s2694 = smul.addr %s2693, 16
          %s2695 = scalar_lea.vmem [#allocation11], %s2694
          %2696 = dma.done %s2692, 256
        $region68: #{tpu_custom_call.1} parent=63 // pred_fallthru
          _
      $region64: #{tpu_custom_call.1} parent=5 // pred_fallthru
        _
    $region6: #{tpu_custom_call.1} parent=1 // loop_footer
      %s25 = sadd.s32 1, %s21
    $region7: #{tpu_custom_call.1} parent=1 // loop_footer_branch
      %20 = sbr.rel target = $region3
    $region8: #{tpu_custom_call.1} parent=1 // loop_exit
      _
    %2697 = vsyncpa [#allocation4], 1
    %s2698 = scalar_lea.sflag [#allocation4], 1
    %2699 = vsyncpa %s2698, 1
    %2700 = vsyncpa [#allocation7], 1
    %s2701 = scalar_lea.sflag [#allocation7], 1
    %2702 = vsyncpa %s2701, 1
    %2703 = vsyncpa [#allocation10], 1
    %2704 = vsyncpa [#allocation5], 1
    %s2705 = scalar_lea.sflag [#allocation5], 1
    %2706 = vsyncpa %s2705, 1

</llo_original>
